<compile_context>
chip_gen: v5e
topology: v5e:2x2
jax: 0.10.0
libtpu: 0.0.40
codegen_flags: <defaults>
</compile_context>

<pallas_src>
import functools

import jax
import jax.numpy as jnp
from jax.experimental import pallas as pl
from jax.experimental.pallas import tpu as pltpu


# -----------------------------------------------------------------------------
# Pallas kernel: grid = (batch_tile, layer).  One invocation = one TransformerLayer
# applied to one batch tile; the activation is carried across layers in VMEM.
# -----------------------------------------------------------------------------
def fused_transformer_kernel(
    x_ref,        # (TB, N, C)       input activation (read at layer 0 only)
    ln1w_ref,     # (1, 1, C)  f32
    ln1b_ref,     # (1, 1, C)  f32
    wq_ref,       # (1, nh, C, hd)   bf16, head-major, scale pre-folded
    wk_ref,       # (1, nh, C, hd)   bf16, head-major
    wv_ref,       # (1, nh, C, hd)   bf16, head-major
    wp_ref,       # (1, nh, hd, C)   bf16, head-major project weight
    bp_ref,       # (1, 1, C)  f32   project bias
    ln2w_ref,     # (1, 1, C)  f32
    ln2b_ref,     # (1, 1, C)  f32
    w1_ref,       # (1, C, H)  bf16  mlp fc1
    b1_ref,       # (1, 1, H)  f32
    w2_ref,       # (1, H, C)  bf16  mlp fc2
    b2_ref,       # (1, 1, C)  f32
    out_ref,      # (TB, N, C)       output (written at the last layer only)
    x_carry,      # VMEM (TB, N, C) f32 scratch: activation carried across layers
    *,
    num_heads: int,
):
    layer = pl.program_id(1)
    n_layers = pl.num_programs(1)
    f32 = jnp.float32
    bf16 = jnp.bfloat16

    # Load the activation from HBM only once per batch tile.
    @pl.when(layer == 0)
    def _():
        x_carry[...] = x_ref[...].astype(f32)

    x = x_carry[...]                          # (TB, N, C) f32
    TB, N, C = x.shape
    M = TB * N
    eps = 1e-5

    def layernorm(v, w, b):
        # Single-pass: E[x] and E[x^2] computed independently (var = E[x^2] - E[x]^2).
        mu = jnp.mean(v, axis=-1, keepdims=True)
        mu2 = jnp.mean(v * v, axis=-1, keepdims=True)
        var = mu2 - mu * mu
        return (v - mu) * jax.lax.rsqrt(var + eps) * w + b

    # ---- attention branch ---------------------------------------------------
    h1 = layernorm(x, ln1w_ref[0], ln1b_ref[0])                           # (TB, N, C) f32
    h1f = h1.reshape(M, C).astype(bf16)                                   # flattened MXU M = TB*N

    wq_h = wq_ref[0]                                                      # (nh, C, hd) bf16
    wk_h = wk_ref[0]
    wv_h = wv_ref[0]
    wp_h = wp_ref[0]                                                      # (nh, hd, C) bf16

    def project_heads(w_h):
        # Head-major projection: per-head MXU matmul -> (nh, M, hd).  No lane slices of the
        # activation; the head axis is a leading dim (scale for q already folded into wq).
        heads = [
            jnp.dot(h1f, w_h[h], preferred_element_type=f32).astype(bf16)
            for h in range(num_heads)
        ]
        return jnp.stack(heads, axis=0)                                   # (nh, M, hd) bf16

    q3 = project_heads(wq_h)
    k3 = project_heads(wk_h)
    v3 = project_heads(wv_h)

    attn_rows = []
    for b in range(TB):                                                   # static batch-row loop
        qb = q3[:, b * N:(b + 1) * N, :]                                  # (nh, N, hd)
        kb = k3[:, b * N:(b + 1) * N, :]
        vb = v3[:, b * N:(b + 1) * N, :]

        # Scores + unnormalized softmax (normalize after PV).
        s = jnp.einsum("hnd,hmd->hnm", qb, kb,
                       preferred_element_type=f32)                        # (nh, N, N) f32
        s = s - jnp.max(s, axis=-1, keepdims=True)
        p = jnp.exp(s)
        l = jnp.sum(p, axis=-1, keepdims=True)                            # (nh, N, 1)
        o = jnp.einsum("hnm,hmd->hnd", p.astype(bf16), vb,
                       preferred_element_type=f32)                        # (nh, N, hd)
        o = o * pl.reciprocal(l, approx=True)                             # == softmax @ V

        # Head merge + output projection: batched per-head contraction + head-sum.
        proj = jnp.einsum("hnd,hdc->hnc", o.astype(bf16), wp_h,
                          preferred_element_type=f32)                     # (nh, N, C)
        attn_rows.append(jnp.sum(proj, axis=0))                           # (N, C)

    attn = jnp.stack(attn_rows, axis=0) + bp_ref[0]                       # (TB, N, C)
    x = x + attn                                                          # residual 1

    # ---- mlp branch ----------------------------------------------------------
    h2 = layernorm(x, ln2w_ref[0], ln2b_ref[0])
    h2f = h2.reshape(M, C).astype(bf16)
    m = jnp.dot(h2f, w1_ref[0], preferred_element_type=f32) + b1_ref[0]   # (M, H)
    m = jnp.maximum(m, 0.0)                                               # relu
    m = jnp.dot(m.astype(bf16), w2_ref[0],
                preferred_element_type=f32) + b2_ref[0]                   # (M, C)
    x = x + m.reshape(TB, N, C)                                           # residual 2
    # dropout with p=0.0 is identity; omitted.

    x_carry[...] = x

    @pl.when(layer == n_layers - 1)
    def _():
        out_ref[...] = x.astype(out_ref.dtype)


# -----------------------------------------------------------------------------
# Batch-tile choice: amortize weight streaming while keeping >= 2 parallel grid
# steps (v7x megacore) whenever the batch allows it.
# -----------------------------------------------------------------------------
def _choose_batch_tile(batch, max_tile=8):
    best = 1
    for tb in range(1, min(batch, max_tile) + 1):
        if batch % tb != 0:
            continue
        if batch // tb >= 2 or batch == 1:
            best = tb
    return best


# -----------------------------------------------------------------------------
# Wrapper: one pallas_call for the whole Transformer (all layers fused).
# -----------------------------------------------------------------------------
def transformer_forward(x, kp, num_heads, batch_tile=None):
    B, N, C = x.shape
    L, nh, _, hd = kp["wq"].shape
    H = kp["w1"].shape[-1]
    assert nh == num_heads

    TB = batch_tile if batch_tile is not None else _choose_batch_tile(B)
    assert B % TB == 0, "batch tile must divide batch"
    n_bt = B // TB

    def wspec(shape):
        nz = len(shape)
        return pl.BlockSpec((1,) + shape, lambda b, l, _nz=nz: (l,) + (0,) * _nz)

    kernel = functools.partial(fused_transformer_kernel, num_heads=num_heads)

    # Advisory cost estimate.  Weights are streamed once per (batch-tile, layer) grid step.
    weight_bytes = sum(int(v.size) * int(v.dtype.itemsize) for v in kp.values())
    flops = B * L * (8 * N * C * C + 4 * N * N * C + 4 * N * C * H)
    transcendentals = B * L * (num_heads * N * N + 2 * N + num_heads * N)
    bytes_accessed = 2 * B * N * C * int(x.dtype.itemsize) + n_bt * weight_bytes
    cost = pl.CostEstimate(flops=int(flops), transcendentals=int(transcendentals),
                           bytes_accessed=int(bytes_accessed))

    # Hardware-aware VMEM budget: explicit limit (v5e's scoped default is only 16 MiB), with
    # headroom below the physical capacity (64 MiB on v7x, 128 MiB on v5e/v6e).
    try:
        vmem_cap = int(pltpu.get_tpu_info().vmem_capacity_bytes)
    except Exception:
        vmem_cap = 64 * 1024 * 1024
    per_layer_w = weight_bytes // L
    act_block = 4 * TB * N * C
    tmp_bytes = 4 * (num_heads * N * N + TB * N * (2 * H + 6 * C) + 3 * TB * N * C)
    per_step_vmem = 2 * per_layer_w + 5 * act_block + tmp_bytes
    vmem_limit = max(32 * 1024 * 1024, int(per_step_vmem * 3 // 2))
    vmem_limit = min(vmem_limit, vmem_cap * 7 // 8)
    # TODO(synk): if 2x one layer's weights no longer fits (large C/H on v7x), slice the MLP hidden
    #             dim H with a third grid axis instead of raising the limit further.

    return pl.pallas_call(
        kernel,
        out_shape=jax.ShapeDtypeStruct((B, N, C), x.dtype),
        grid=(n_bt, L),
        in_specs=[
            pl.BlockSpec((TB, N, C), lambda b, l: (b, 0, 0)),   # x
            wspec((1, C)),                                      # ln1 weight
            wspec((1, C)),                                      # ln1 bias
            wspec((num_heads, C, hd)),                          # wq (head-major, scaled)
            wspec((num_heads, C, hd)),                          # wk
            wspec((num_heads, C, hd)),                          # wv
            wspec((num_heads, hd, C)),                          # wp (head-major)
            wspec((1, C)),                                      # bp
            wspec((1, C)),                                      # ln2 weight
            wspec((1, C)),                                      # ln2 bias
            wspec((C, H)),                                      # w1
            wspec((1, H)),                                      # b1
            wspec((H, C)),                                      # w2
            wspec((1, C)),                                      # b2
        ],
        out_specs=pl.BlockSpec((TB, N, C), lambda b, l: (b, 0, 0)),
        scratch_shapes=[pltpu.VMEM((TB, N, C), jnp.float32)],
        input_output_aliases={0: 0},
        compiler_params=pltpu.CompilerParams(
            dimension_semantics=("parallel", "arbitrary"),
            vmem_limit_bytes=int(vmem_limit)),
        cost_estimate=cost,
    )(
        x,
        kp["ln1_w"], kp["ln1_b"],
        kp["wq"], kp["wk"], kp["wv"],
        kp["wp"], kp["bp"],
        kp["ln2_w"], kp["ln2_b"],
        kp["w1"], kp["b1"], kp["w2"], kp["b2"],
    )


# -----------------------------------------------------------------------------
# Pure-JAX reference (mirrors the PyTorch forward, full f32) for correctness.
# -----------------------------------------------------------------------------
def reference_forward(x, params, num_heads):
    eps = 1e-5
    L = params["wq"].shape[0]
    B, N, C = x.shape
    hd = C // num_heads

    def ln(v, w, b):
        mu = jnp.mean(v, axis=-1, keepdims=True)
        var = jnp.mean((v - mu) ** 2, axis=-1, keepdims=True)
        return (v - mu) / jnp.sqrt(var + eps) * w + b

    for l in range(L):
        h1 = ln(x, params["ln1_w"][l], params["ln1_b"][l])
        q = (h1 @ params["wq"][l]).reshape(B, N, num_heads, hd)
        k = (h1 @ params["wk"][l]).reshape(B, N, num_heads, hd)
        v = (h1 @ params["wv"][l]).reshape(B, N, num_heads, hd)
        att = jnp.einsum("bnhd,bmhd->bnmh", q, k) * (hd ** -0.5)
        att = jax.nn.softmax(att, axis=2)
        out = jnp.einsum("bnmh,bmhd->bnhd", att, v).reshape(B, N, C)
        out = out @ params["wp"][l] + params["bp"][l]
        x = x + out
        h2 = ln(x, params["ln2_w"][l], params["ln2_b"][l])
        m = jnp.maximum(h2 @ params["w1"][l] + params["b1"][l], 0.0)
        x = x + (m @ params["w2"][l] + params["b2"][l])
    return x


# -----------------------------------------------------------------------------
# Canonical (f32, x @ W layout) parameters + packing into the kernel layout
# (head-major, bf16, attention scale folded into wq).
# -----------------------------------------------------------------------------
def init_params(key, num_layers, dim_self, num_heads, mlp_ratio):
    C = dim_self
    H = int(C * mlp_ratio)
    L = num_layers
    std = 0.1
    ks = jax.random.split(key, 12)
    nrm = lambda k, s: std * jax.random.normal(k, s, jnp.float32)
    return {
        "ln1_w": 1.0 + 0.1 * jax.random.normal(ks[0], (L, 1, C), jnp.float32),
        "ln1_b": 0.05 * jax.random.normal(ks[1], (L, 1, C), jnp.float32),
        "wq": nrm(ks[2], (L, C, C)),
        "wk": nrm(ks[3], (L, C, C)),
        "wv": nrm(ks[4], (L, C, C)),
        "wp": nrm(ks[5], (L, C, C)),
        "bp": 0.05 * jax.random.normal(ks[6], (L, 1, C), jnp.float32),
        "ln2_w": 1.0 + 0.1 * jax.random.normal(ks[7], (L, 1, C), jnp.float32),
        "ln2_b": 0.05 * jax.random.normal(ks[8], (L, 1, C), jnp.float32),
        "w1": nrm(ks[9], (L, C, H)),
        "b1": 0.05 * jax.random.normal(ks[10], (L, 1, H), jnp.float32),
        "w2": nrm(ks[11], (L, H, C)),
        "b2": 0.02 * jnp.ones((L, 1, C), jnp.float32),
    }


def pack_params(params, num_heads):
    L, C, _ = params["wq"].shape
    hd = C // num_heads
    scale = hd ** -0.5
    bf16 = jnp.bfloat16

    def head_major_in(w):  # (L, C, nh*hd) -> (L, nh, C, hd)
        return w.reshape(L, C, num_heads, hd).transpose(0, 2, 1, 3)

    return {
        "ln1_w": params["ln1_w"], "ln1_b": params["ln1_b"],
        "wq": (head_major_in(params["wq"]) * scale).astype(bf16),
        "wk": head_major_in(params["wk"]).astype(bf16),
        "wv": head_major_in(params["wv"]).astype(bf16),
        "wp": params["wp"].reshape(L, num_heads, hd, C).astype(bf16),
        "bp": params["bp"],
        "ln2_w": params["ln2_w"], "ln2_b": params["ln2_b"],
        "w1": params["w1"].astype(bf16), "b1": params["b1"],
        "w2": params["w2"].astype(bf16), "b2": params["b2"],
    }


if __name__ == "__main__":
    # Small config: Transformer(dim_self=32, num_heads=4, num_layers=2, mlp_ratio=2.0)
    B, N, C = 2, 8, 32
    num_heads = 4
    num_layers = 2
    mlp_ratio = 2.0

    key = jax.random.PRNGKey(0)
    kx, kp = jax.random.split(key)
    x = jax.random.normal(kx, (B, N, C), jnp.float32)
    params = init_params(kp, num_layers, C, num_heads, mlp_ratio)
    kparams = pack_params(params, num_heads)

    # Reference first (x may be donated to the kernel output via input_output_aliases).
    ref = jax.block_until_ready(reference_forward(x, params, num_heads))

    out = transformer_forward(x, kparams, num_heads)
    out = jax.block_until_ready(out)

    assert out.shape == (B, N, C)
    err = jnp.max(jnp.abs(out - ref))
    # bf16 MXU operands + approx reciprocal => compare at bf16-appropriate tolerance.
    assert jnp.allclose(out, ref, atol=2e-2, rtol=2e-2), f"mismatch vs reference (max abs err {err})"

    # TODO(synk): mask / enc_dec cross-attention paths are never taken with the default
    # forward call (y=None, mask=None, enc_dec=False) and are not implemented.
    print("KERNEL_OK")
</pallas_src>

<mosaic_0001>
module attributes {stable_mosaic.version = 11 : i64} {
  func.func @fused_transformer_kernel(%arg0: i32, %arg1: i32, %arg2: memref<1x8x32xf32, #tpu.memory_space<vmem>>, %arg3: memref<1x1x32xf32, #tpu.memory_space<vmem>>, %arg4: memref<1x1x32xf32, #tpu.memory_space<vmem>>, %arg5: memref<1x4x32x8xbf16, #tpu.memory_space<vmem>>, %arg6: memref<1x4x32x8xbf16, #tpu.memory_space<vmem>>, %arg7: memref<1x4x32x8xbf16, #tpu.memory_space<vmem>>, %arg8: memref<1x4x8x32xbf16, #tpu.memory_space<vmem>>, %arg9: memref<1x1x32xf32, #tpu.memory_space<vmem>>, %arg10: memref<1x1x32xf32, #tpu.memory_space<vmem>>, %arg11: memref<1x1x32xf32, #tpu.memory_space<vmem>>, %arg12: memref<1x32x64xbf16, #tpu.memory_space<vmem>>, %arg13: memref<1x1x64xf32, #tpu.memory_space<vmem>>, %arg14: memref<1x64x32xbf16, #tpu.memory_space<vmem>>, %arg15: memref<1x1x32xf32, #tpu.memory_space<vmem>>, %arg16: memref<1x8x32xf32, #tpu.memory_space<vmem>>, %arg17: memref<1x8x32xf32, #tpu.memory_space<vmem>>) attributes {dimension_semantics = [#tpu.dimension_semantics<parallel>, #tpu.dimension_semantics<arbitrary>], iteration_bounds = array<i64: 2, 2>, scalar_prefetch = 0 : i64, scratch_operands = 1 : i64, tpu.core_type = #tpu.core_type<tc>, window_params = [{transform_indices = @transform_0, window_bounds = array<i64: 1, 8, 32>}, {transform_indices = @transform_1, window_bounds = array<i64: 1, 1, 32>}, {transform_indices = @transform_2, window_bounds = array<i64: 1, 1, 32>}, {transform_indices = @transform_3, window_bounds = array<i64: 1, 4, 32, 8>}, {transform_indices = @transform_4, window_bounds = array<i64: 1, 4, 32, 8>}, {transform_indices = @transform_5, window_bounds = array<i64: 1, 4, 32, 8>}, {transform_indices = @transform_6, window_bounds = array<i64: 1, 4, 8, 32>}, {transform_indices = @transform_7, window_bounds = array<i64: 1, 1, 32>}, {transform_indices = @transform_8, window_bounds = array<i64: 1, 1, 32>}, {transform_indices = @transform_9, window_bounds = array<i64: 1, 1, 32>}, {transform_indices = @transform_10, window_bounds = array<i64: 1, 32, 64>}, {transform_indices = @transform_11, window_bounds = array<i64: 1, 1, 64>}, {transform_indices = @transform_12, window_bounds = array<i64: 1, 64, 32>}, {transform_indices = @transform_13, window_bounds = array<i64: 1, 1, 32>}, {transform_indices = @transform_14, window_bounds = array<i64: 1, 8, 32>}]} {
    %c0_i32 = arith.constant 0 : i32
    %0 = arith.cmpi eq, %arg1, %c0_i32 : i32
    %1 = arith.extui %0 : i1 to i32
    %c0_i32_0 = arith.constant 0 : i32
    %2 = arith.cmpi ne, %1, %c0_i32_0 : i32
    scf.if %2 {
      %c0_80 = arith.constant 0 : index
      %c0_81 = arith.constant 0 : index
      %c0_82 = arith.constant 0 : index
      %181 = vector.load %arg2[%c0_80, %c0_81, %c0_82] : memref<1x8x32xf32, #tpu.memory_space<vmem>>, vector<1x8x32xf32>
      %c0_83 = arith.constant 0 : index
      %c0_84 = arith.constant 0 : index
      %c0_85 = arith.constant 0 : index
      %182 = vector.load %arg17[%c0_83, %c0_84, %c0_85] : memref<1x8x32xf32, #tpu.memory_space<vmem>>, vector<1x8x32xf32>
      tpu.vector_store %arg17[%c0_83, %c0_84, %c0_85], %181 {strides = array<i32>} : memref<1x8x32xf32, #tpu.memory_space<vmem>>, vector<1x8x32xf32>,
    } else {
    }
    %c0 = arith.constant 0 : index
    %c0_1 = arith.constant 0 : index
    %c0_2 = arith.constant 0 : index
    %3 = vector.load %arg17[%c0, %c0_1, %c0_2] : memref<1x8x32xf32, #tpu.memory_space<vmem>>, vector<1x8x32xf32>
    %c0_3 = arith.constant 0 : index
    %c0_4 = arith.constant 0 : index
    %c0_5 = arith.constant 0 : index
    %4 = vector.load %arg3[%c0_3, %c0_4, %c0_5] : memref<1x1x32xf32, #tpu.memory_space<vmem>>, vector<1x1x32xf32>
    %5 = vector.shape_cast %4 : vector<1x1x32xf32> to vector<1x32xf32>
    %c0_6 = arith.constant 0 : index
    %c0_7 = arith.constant 0 : index
    %c0_8 = arith.constant 0 : index
    %6 = vector.load %arg4[%c0_6, %c0_7, %c0_8] : memref<1x1x32xf32, #tpu.memory_space<vmem>>, vector<1x1x32xf32>
    %7 = vector.shape_cast %6 : vector<1x1x32xf32> to vector<1x32xf32>
    %cst = arith.constant dense<0.000000e+00> : vector<1x8xf32>
    %8 = vector.multi_reduction <add>, %3, %cst [2] : vector<1x8x32xf32> to vector<1x8xf32>
    %9 = vector.shape_cast %8 : vector<1x8xf32> to vector<1x8x1xf32>
    %cst_9 = arith.constant 3.200000e+01 : f32
    %10 = vector.broadcast %cst_9 : f32 to vector<1x8x1xf32>
    %11 = arith.divf %9, %10 : vector<1x8x1xf32>
    %12 = arith.mulf %3, %3 : vector<1x8x32xf32>
    %cst_10 = arith.constant dense<0.000000e+00> : vector<1x8xf32>
    %13 = vector.multi_reduction <add>, %12, %cst_10 [2] : vector<1x8x32xf32> to vector<1x8xf32>
    %14 = vector.shape_cast %13 : vector<1x8xf32> to vector<1x8x1xf32>
    %cst_11 = arith.constant 3.200000e+01 : f32
    %15 = vector.broadcast %cst_11 : f32 to vector<1x8x1xf32>
    %16 = arith.divf %14, %15 : vector<1x8x1xf32>
    %17 = arith.mulf %11, %11 : vector<1x8x1xf32>
    %18 = arith.subf %16, %17 : vector<1x8x1xf32>
    %19 = vector.broadcast %11 : vector<1x8x1xf32> to vector<1x8x32xf32>
    %20 = arith.subf %3, %19 : vector<1x8x32xf32>
    %cst_12 = arith.constant 9.99999974E-6 : f32
    %21 = vector.broadcast %cst_12 : f32 to vector<1x8x1xf32>
    %22 = arith.addf %18, %21 : vector<1x8x1xf32>
    %23 = math.rsqrt %22 : vector<1x8x1xf32>
    %24 = vector.broadcast %23 : vector<1x8x1xf32> to vector<1x8x32xf32>
    %25 = arith.mulf %20, %24 : vector<1x8x32xf32>
    %26 = vector.shape_cast %5 : vector<1x32xf32> to vector<1x1x32xf32>
    %27 = vector.broadcast %26 : vector<1x1x32xf32> to vector<1x8x32xf32>
    %28 = arith.mulf %25, %27 : vector<1x8x32xf32>
    %29 = vector.shape_cast %7 : vector<1x32xf32> to vector<1x1x32xf32>
    %30 = vector.broadcast %29 : vector<1x1x32xf32> to vector<1x8x32xf32>
    %31 = arith.addf %28, %30 : vector<1x8x32xf32>
    %32 = vector.shape_cast %31 : vector<1x8x32xf32> to vector<8x32xf32>
    %33 = arith.truncf %32 : vector<8x32xf32> to vector<8x32xbf16>
    %c0_13 = arith.constant 0 : index
    %c0_14 = arith.constant 0 : index
    %c0_15 = arith.constant 0 : index
    %c0_16 = arith.constant 0 : index
    %34 = vector.load %arg5[%c0_13, %c0_14, %c0_15, %c0_16] : memref<1x4x32x8xbf16, #tpu.memory_space<vmem>>, vector<1x4x32x8xbf16>
    %35 = vector.shape_cast %34 : vector<1x4x32x8xbf16> to vector<4x32x8xbf16>
    %c0_17 = arith.constant 0 : index
    %c0_18 = arith.constant 0 : index
    %c0_19 = arith.constant 0 : index
    %c0_20 = arith.constant 0 : index
    %36 = vector.load %arg6[%c0_17, %c0_18, %c0_19, %c0_20] : memref<1x4x32x8xbf16, #tpu.memory_space<vmem>>, vector<1x4x32x8xbf16>
    %37 = vector.shape_cast %36 : vector<1x4x32x8xbf16> to vector<4x32x8xbf16>
    %c0_21 = arith.constant 0 : index
    %c0_22 = arith.constant 0 : index
    %c0_23 = arith.constant 0 : index
    %c0_24 = arith.constant 0 : index
    %38 = vector.load %arg7[%c0_21, %c0_22, %c0_23, %c0_24] : memref<1x4x32x8xbf16, #tpu.memory_space<vmem>>, vector<1x4x32x8xbf16>
    %39 = vector.shape_cast %38 : vector<1x4x32x8xbf16> to vector<4x32x8xbf16>
    %c0_25 = arith.constant 0 : index
    %c0_26 = arith.constant 0 : index
    %c0_27 = arith.constant 0 : index
    %c0_28 = arith.constant 0 : index
    %40 = vector.load %arg8[%c0_25, %c0_26, %c0_27, %c0_28] : memref<1x4x8x32xbf16, #tpu.memory_space<vmem>>, vector<1x4x8x32xbf16>
    %41 = vector.shape_cast %40 : vector<1x4x8x32xbf16> to vector<4x8x32xbf16>
    %42 = vector.extract_strided_slice %35 {offsets = [0, 0, 0], sizes = [1, 32, 8], strides = [1, 1, 1]} : vector<4x32x8xbf16> to vector<1x32x8xbf16>
    %43 = vector.shape_cast %42 : vector<1x32x8xbf16> to vector<32x8xbf16>
    %cst_29 = arith.constant dense<0.000000e+00> : vector<8x8xf32>
    %44 = tpu.matmul %33, %43, %cst_29 {dimension_numbers = #tpu.dot_dimension_numbers<[1], [0], [0], [1], [0, 0, 1, 1], [], []>} : vector<8x32xbf16>, vector<32x8xbf16>, vector<8x8xf32> -> vector<8x8xf32>
    %45 = arith.truncf %44 : vector<8x8xf32> to vector<8x8xbf16>
    %46 = vector.extract_strided_slice %35 {offsets = [1, 0, 0], sizes = [1, 32, 8], strides = [1, 1, 1]} : vector<4x32x8xbf16> to vector<1x32x8xbf16>
    %47 = vector.shape_cast %46 : vector<1x32x8xbf16> to vector<32x8xbf16>
    %cst_30 = arith.constant dense<0.000000e+00> : vector<8x8xf32>
    %48 = tpu.matmul %33, %47, %cst_30 {dimension_numbers = #tpu.dot_dimension_numbers<[1], [0], [0], [1], [0, 0, 1, 1], [], []>} : vector<8x32xbf16>, vector<32x8xbf16>, vector<8x8xf32> -> vector<8x8xf32>
    %49 = arith.truncf %48 : vector<8x8xf32> to vector<8x8xbf16>
    %50 = vector.extract_strided_slice %35 {offsets = [2, 0, 0], sizes = [1, 32, 8], strides = [1, 1, 1]} : vector<4x32x8xbf16> to vector<1x32x8xbf16>
    %51 = vector.shape_cast %50 : vector<1x32x8xbf16> to vector<32x8xbf16>
    %cst_31 = arith.constant dense<0.000000e+00> : vector<8x8xf32>
    %52 = tpu.matmul %33, %51, %cst_31 {dimension_numbers = #tpu.dot_dimension_numbers<[1], [0], [0], [1], [0, 0, 1, 1], [], []>} : vector<8x32xbf16>, vector<32x8xbf16>, vector<8x8xf32> -> vector<8x8xf32>
    %53 = arith.truncf %52 : vector<8x8xf32> to vector<8x8xbf16>
    %54 = vector.extract_strided_slice %35 {offsets = [3, 0, 0], sizes = [1, 32, 8], strides = [1, 1, 1]} : vector<4x32x8xbf16> to vector<1x32x8xbf16>
    %55 = vector.shape_cast %54 : vector<1x32x8xbf16> to vector<32x8xbf16>
    %cst_32 = arith.constant dense<0.000000e+00> : vector<8x8xf32>
    %56 = tpu.matmul %33, %55, %cst_32 {dimension_numbers = #tpu.dot_dimension_numbers<[1], [0], [0], [1], [0, 0, 1, 1], [], []>} : vector<8x32xbf16>, vector<32x8xbf16>, vector<8x8xf32> -> vector<8x8xf32>
    %57 = arith.truncf %56 : vector<8x8xf32> to vector<8x8xbf16>
    %58 = vector.shape_cast %45 : vector<8x8xbf16> to vector<1x8x8xbf16>
    %59 = vector.shape_cast %49 : vector<8x8xbf16> to vector<1x8x8xbf16>
    %60 = vector.shape_cast %53 : vector<8x8xbf16> to vector<1x8x8xbf16>
    %61 = vector.shape_cast %57 : vector<8x8xbf16> to vector<1x8x8xbf16>
    %62 = tpu.concatenate %58, %59, %60, %61 in 0 : vector<1x8x8xbf16>, vector<1x8x8xbf16>, vector<1x8x8xbf16>, vector<1x8x8xbf16> -> vector<4x8x8xbf16>
    %63 = vector.extract_strided_slice %37 {offsets = [0, 0, 0], sizes = [1, 32, 8], strides = [1, 1, 1]} : vector<4x32x8xbf16> to vector<1x32x8xbf16>
    %64 = vector.shape_cast %63 : vector<1x32x8xbf16> to vector<32x8xbf16>
    %cst_33 = arith.constant dense<0.000000e+00> : vector<8x8xf32>
    %65 = tpu.matmul %33, %64, %cst_33 {dimension_numbers = #tpu.dot_dimension_numbers<[1], [0], [0], [1], [0, 0, 1, 1], [], []>} : vector<8x32xbf16>, vector<32x8xbf16>, vector<8x8xf32> -> vector<8x8xf32>
    %66 = arith.truncf %65 : vector<8x8xf32> to vector<8x8xbf16>
    %67 = vector.extract_strided_slice %37 {offsets = [1, 0, 0], sizes = [1, 32, 8], strides = [1, 1, 1]} : vector<4x32x8xbf16> to vector<1x32x8xbf16>
    %68 = vector.shape_cast %67 : vector<1x32x8xbf16> to vector<32x8xbf16>
    %cst_34 = arith.constant dense<0.000000e+00> : vector<8x8xf32>
    %69 = tpu.matmul %33, %68, %cst_34 {dimension_numbers = #tpu.dot_dimension_numbers<[1], [0], [0], [1], [0, 0, 1, 1], [], []>} : vector<8x32xbf16>, vector<32x8xbf16>, vector<8x8xf32> -> vector<8x8xf32>
    %70 = arith.truncf %69 : vector<8x8xf32> to vector<8x8xbf16>
    %71 = vector.extract_strided_slice %37 {offsets = [2, 0, 0], sizes = [1, 32, 8], strides = [1, 1, 1]} : vector<4x32x8xbf16> to vector<1x32x8xbf16>
    %72 = vector.shape_cast %71 : vector<1x32x8xbf16> to vector<32x8xbf16>
    %cst_35 = arith.constant dense<0.000000e+00> : vector<8x8xf32>
    %73 = tpu.matmul %33, %72, %cst_35 {dimension_numbers = #tpu.dot_dimension_numbers<[1], [0], [0], [1], [0, 0, 1, 1], [], []>} : vector<8x32xbf16>, vector<32x8xbf16>, vector<8x8xf32> -> vector<8x8xf32>
    %74 = arith.truncf %73 : vector<8x8xf32> to vector<8x8xbf16>
    %75 = vector.extract_strided_slice %37 {offsets = [3, 0, 0], sizes = [1, 32, 8], strides = [1, 1, 1]} : vector<4x32x8xbf16> to vector<1x32x8xbf16>
    %76 = vector.shape_cast %75 : vector<1x32x8xbf16> to vector<32x8xbf16>
    %cst_36 = arith.constant dense<0.000000e+00> : vector<8x8xf32>
    %77 = tpu.matmul %33, %76, %cst_36 {dimension_numbers = #tpu.dot_dimension_numbers<[1], [0], [0], [1], [0, 0, 1, 1], [], []>} : vector<8x32xbf16>, vector<32x8xbf16>, vector<8x8xf32> -> vector<8x8xf32>
    %78 = arith.truncf %77 : vector<8x8xf32> to vector<8x8xbf16>
    %79 = vector.shape_cast %66 : vector<8x8xbf16> to vector<1x8x8xbf16>
    %80 = vector.shape_cast %70 : vector<8x8xbf16> to vector<1x8x8xbf16>
    %81 = vector.shape_cast %74 : vector<8x8xbf16> to vector<1x8x8xbf16>
    %82 = vector.shape_cast %78 : vector<8x8xbf16> to vector<1x8x8xbf16>
    %83 = tpu.concatenate %79, %80, %81, %82 in 0 : vector<1x8x8xbf16>, vector<1x8x8xbf16>, vector<1x8x8xbf16>, vector<1x8x8xbf16> -> vector<4x8x8xbf16>
    %84 = vector.extract_strided_slice %39 {offsets = [0, 0, 0], sizes = [1, 32, 8], strides = [1, 1, 1]} : vector<4x32x8xbf16> to vector<1x32x8xbf16>
    %85 = vector.shape_cast %84 : vector<1x32x8xbf16> to vector<32x8xbf16>
    %cst_37 = arith.constant dense<0.000000e+00> : vector<8x8xf32>
    %86 = tpu.matmul %33, %85, %cst_37 {dimension_numbers = #tpu.dot_dimension_numbers<[1], [0], [0], [1], [0, 0, 1, 1], [], []>} : vector<8x32xbf16>, vector<32x8xbf16>, vector<8x8xf32> -> vector<8x8xf32>
    %87 = arith.truncf %86 : vector<8x8xf32> to vector<8x8xbf16>
    %88 = vector.extract_strided_slice %39 {offsets = [1, 0, 0], sizes = [1, 32, 8], strides = [1, 1, 1]} : vector<4x32x8xbf16> to vector<1x32x8xbf16>
    %89 = vector.shape_cast %88 : vector<1x32x8xbf16> to vector<32x8xbf16>
    %cst_38 = arith.constant dense<0.000000e+00> : vector<8x8xf32>
    %90 = tpu.matmul %33, %89, %cst_38 {dimension_numbers = #tpu.dot_dimension_numbers<[1], [0], [0], [1], [0, 0, 1, 1], [], []>} : vector<8x32xbf16>, vector<32x8xbf16>, vector<8x8xf32> -> vector<8x8xf32>
    %91 = arith.truncf %90 : vector<8x8xf32> to vector<8x8xbf16>
    %92 = vector.extract_strided_slice %39 {offsets = [2, 0, 0], sizes = [1, 32, 8], strides = [1, 1, 1]} : vector<4x32x8xbf16> to vector<1x32x8xbf16>
    %93 = vector.shape_cast %92 : vector<1x32x8xbf16> to vector<32x8xbf16>
    %cst_39 = arith.constant dense<0.000000e+00> : vector<8x8xf32>
    %94 = tpu.matmul %33, %93, %cst_39 {dimension_numbers = #tpu.dot_dimension_numbers<[1], [0], [0], [1], [0, 0, 1, 1], [], []>} : vector<8x32xbf16>, vector<32x8xbf16>, vector<8x8xf32> -> vector<8x8xf32>
    %95 = arith.truncf %94 : vector<8x8xf32> to vector<8x8xbf16>
    %96 = vector.extract_strided_slice %39 {offsets = [3, 0, 0], sizes = [1, 32, 8], strides = [1, 1, 1]} : vector<4x32x8xbf16> to vector<1x32x8xbf16>
    %97 = vector.shape_cast %96 : vector<1x32x8xbf16> to vector<32x8xbf16>
    %cst_40 = arith.constant dense<0.000000e+00> : vector<8x8xf32>
    %98 = tpu.matmul %33, %97, %cst_40 {dimension_numbers = #tpu.dot_dimension_numbers<[1], [0], [0], [1], [0, 0, 1, 1], [], []>} : vector<8x32xbf16>, vector<32x8xbf16>, vector<8x8xf32> -> vector<8x8xf32>
    %99 = arith.truncf %98 : vector<8x8xf32> to vector<8x8xbf16>
    %100 = vector.shape_cast %87 : vector<8x8xbf16> to vector<1x8x8xbf16>
    %101 = vector.shape_cast %91 : vector<8x8xbf16> to vector<1x8x8xbf16>
    %102 = vector.shape_cast %95 : vector<8x8xbf16> to vector<1x8x8xbf16>
    %103 = vector.shape_cast %99 : vector<8x8xbf16> to vector<1x8x8xbf16>
    %104 = tpu.concatenate %100, %101, %102, %103 in 0 : vector<1x8x8xbf16>, vector<1x8x8xbf16>, vector<1x8x8xbf16>, vector<1x8x8xbf16> -> vector<4x8x8xbf16>
    "tpu.trace_start"() <{level = 10 : i32, message = "hnd,hmd->hnm"}> : () -> ()
    %cst_41 = arith.constant dense<0.000000e+00> : vector<4x8x8xf32>
    %105 = tpu.matmul %62, %83, %cst_41 {dimension_numbers = #tpu.dot_dimension_numbers<[2], [2], [1], [1], [0, 0, 0, 1, 1, 1], [0], [0]>} : vector<4x8x8xbf16>, vector<4x8x8xbf16>, vector<4x8x8xf32> -> vector<4x8x8xf32>
    "tpu.trace_stop"() : () -> ()
    %cst_42 = arith.constant dense<0xFF800000> : vector<4x8xf32>
    %106 = vector.multi_reduction <maximumf>, %105, %cst_42 [2] : vector<4x8x8xf32> to vector<4x8xf32>
    %107 = vector.shape_cast %106 : vector<4x8xf32> to vector<4x8x1xf32>
    %108 = vector.broadcast %107 : vector<4x8x1xf32> to vector<4x8x8xf32>
    %109 = arith.subf %105, %108 : vector<4x8x8xf32>
    %110 = math.exp %109 : vector<4x8x8xf32>
    %cst_43 = arith.constant dense<0.000000e+00> : vector<4x8xf32>
    %111 = vector.multi_reduction <add>, %110, %cst_43 [2] : vector<4x8x8xf32> to vector<4x8xf32>
    %112 = vector.shape_cast %111 : vector<4x8xf32> to vector<4x8x1xf32>
    %113 = arith.truncf %110 : vector<4x8x8xf32> to vector<4x8x8xbf16>
    "tpu.trace_start"() <{level = 10 : i32, message = "hnm,hmd->hnd"}> : () -> ()
    %cst_44 = arith.constant dense<0.000000e+00> : vector<4x8x8xf32>
    %114 = tpu.matmul %113, %104, %cst_44 {dimension_numbers = #tpu.dot_dimension_numbers<[2], [1], [1], [2], [0, 0, 0, 1, 1, 2], [0], [0]>} : vector<4x8x8xbf16>, vector<4x8x8xbf16>, vector<4x8x8xf32> -> vector<4x8x8xf32>
    "tpu.trace_stop"() : () -> ()
    %115 = tpu.reciprocal %112 {approx = true} : vector<4x8x1xf32> -> vector<4x8x1xf32>
    %116 = vector.broadcast %115 : vector<4x8x1xf32> to vector<4x8x8xf32>
    %117 = arith.mulf %114, %116 : vector<4x8x8xf32>
    %118 = arith.truncf %117 : vector<4x8x8xf32> to vector<4x8x8xbf16>
    "tpu.trace_start"() <{level = 10 : i32, message = "hnd,hdc->hnc"}> : () -> ()
    %cst_45 = arith.constant dense<0.000000e+00> : vector<4x8x32xf32>
    %119 = tpu.matmul %118, %41, %cst_45 {dimension_numbers = #tpu.dot_dimension_numbers<[2], [1], [1], [2], [0, 0, 0, 1, 1, 2], [0], [0]>} : vector<4x8x8xbf16>, vector<4x8x32xbf16>, vector<4x8x32xf32> -> vector<4x8x32xf32>
    "tpu.trace_stop"() : () -> ()
    %cst_46 = arith.constant dense<0.000000e+00> : vector<8x32xf32>
    %120 = vector.multi_reduction <add>, %119, %cst_46 [0] : vector<4x8x32xf32> to vector<8x32xf32>
    %121 = vector.shape_cast %120 : vector<8x32xf32> to vector<1x8x32xf32>
    %c0_47 = arith.constant 0 : index
    %c0_48 = arith.constant 0 : index
    %c0_49 = arith.constant 0 : index
    %122 = vector.load %arg9[%c0_47, %c0_48, %c0_49] : memref<1x1x32xf32, #tpu.memory_space<vmem>>, vector<1x1x32xf32>
    %123 = vector.shape_cast %122 : vector<1x1x32xf32> to vector<1x32xf32>
    %124 = vector.shape_cast %123 : vector<1x32xf32> to vector<1x1x32xf32>
    %125 = vector.broadcast %124 : vector<1x1x32xf32> to vector<1x8x32xf32>
    %126 = arith.addf %121, %125 : vector<1x8x32xf32>
    %127 = arith.addf %3, %126 : vector<1x8x32xf32>
    %c0_50 = arith.constant 0 : index
    %c0_51 = arith.constant 0 : index
    %c0_52 = arith.constant 0 : index
    %128 = vector.load %arg10[%c0_50, %c0_51, %c0_52] : memref<1x1x32xf32, #tpu.memory_space<vmem>>, vector<1x1x32xf32>
    %129 = vector.shape_cast %128 : vector<1x1x32xf32> to vector<1x32xf32>
    %c0_53 = arith.constant 0 : index
    %c0_54 = arith.constant 0 : index
    %c0_55 = arith.constant 0 : index
    %130 = vector.load %arg11[%c0_53, %c0_54, %c0_55] : memref<1x1x32xf32, #tpu.memory_space<vmem>>, vector<1x1x32xf32>
    %131 = vector.shape_cast %130 : vector<1x1x32xf32> to vector<1x32xf32>
    %cst_56 = arith.constant dense<0.000000e+00> : vector<1x8xf32>
    %132 = vector.multi_reduction <add>, %127, %cst_56 [2] : vector<1x8x32xf32> to vector<1x8xf32>
    %133 = vector.shape_cast %132 : vector<1x8xf32> to vector<1x8x1xf32>
    %cst_57 = arith.constant 3.200000e+01 : f32
    %134 = vector.broadcast %cst_57 : f32 to vector<1x8x1xf32>
    %135 = arith.divf %133, %134 : vector<1x8x1xf32>
    %136 = arith.mulf %127, %127 : vector<1x8x32xf32>
    %cst_58 = arith.constant dense<0.000000e+00> : vector<1x8xf32>
    %137 = vector.multi_reduction <add>, %136, %cst_58 [2] : vector<1x8x32xf32> to vector<1x8xf32>
    %138 = vector.shape_cast %137 : vector<1x8xf32> to vector<1x8x1xf32>
    %cst_59 = arith.constant 3.200000e+01 : f32
    %139 = vector.broadcast %cst_59 : f32 to vector<1x8x1xf32>
    %140 = arith.divf %138, %139 : vector<1x8x1xf32>
    %141 = arith.mulf %135, %135 : vector<1x8x1xf32>
    %142 = arith.subf %140, %141 : vector<1x8x1xf32>
    %143 = vector.broadcast %135 : vector<1x8x1xf32> to vector<1x8x32xf32>
    %144 = arith.subf %127, %143 : vector<1x8x32xf32>
    %cst_60 = arith.constant 9.99999974E-6 : f32
    %145 = vector.broadcast %cst_60 : f32 to vector<1x8x1xf32>
    %146 = arith.addf %142, %145 : vector<1x8x1xf32>
    %147 = math.rsqrt %146 : vector<1x8x1xf32>
    %148 = vector.broadcast %147 : vector<1x8x1xf32> to vector<1x8x32xf32>
    %149 = arith.mulf %144, %148 : vector<1x8x32xf32>
    %150 = vector.shape_cast %129 : vector<1x32xf32> to vector<1x1x32xf32>
    %151 = vector.broadcast %150 : vector<1x1x32xf32> to vector<1x8x32xf32>
    %152 = arith.mulf %149, %151 : vector<1x8x32xf32>
    %153 = vector.shape_cast %131 : vector<1x32xf32> to vector<1x1x32xf32>
    %154 = vector.broadcast %153 : vector<1x1x32xf32> to vector<1x8x32xf32>
    %155 = arith.addf %152, %154 : vector<1x8x32xf32>
    %156 = vector.shape_cast %155 : vector<1x8x32xf32> to vector<8x32xf32>
    %157 = arith.truncf %156 : vector<8x32xf32> to vector<8x32xbf16>
    %c0_61 = arith.constant 0 : index
    %c0_62 = arith.constant 0 : index
    %c0_63 = arith.constant 0 : index
    %158 = vector.load %arg12[%c0_61, %c0_62, %c0_63] : memref<1x32x64xbf16, #tpu.memory_space<vmem>>, vector<1x32x64xbf16>
    %159 = vector.shape_cast %158 : vector<1x32x64xbf16> to vector<32x64xbf16>
    %cst_64 = arith.constant dense<0.000000e+00> : vector<8x64xf32>
    %160 = tpu.matmul %157, %159, %cst_64 {dimension_numbers = #tpu.dot_dimension_numbers<[1], [0], [0], [1], [0, 0, 1, 1], [], []>} : vector<8x32xbf16>, vector<32x64xbf16>, vector<8x64xf32> -> vector<8x64xf32>
    %c0_65 = arith.constant 0 : index
    %c0_66 = arith.constant 0 : index
    %c0_67 = arith.constant 0 : index
    %161 = vector.load %arg13[%c0_65, %c0_66, %c0_67] : memref<1x1x64xf32, #tpu.memory_space<vmem>>, vector<1x1x64xf32>
    %162 = vector.shape_cast %161 : vector<1x1x64xf32> to vector<1x64xf32>
    %163 = vector.broadcast %162 : vector<1x64xf32> to vector<8x64xf32>
    %164 = arith.addf %160, %163 : vector<8x64xf32>
    %cst_68 = arith.constant 0.000000e+00 : f32
    %165 = vector.broadcast %cst_68 : f32 to vector<8x64xf32>
    %166 = arith.maximumf %164, %165 : vector<8x64xf32>
    %167 = arith.truncf %166 : vector<8x64xf32> to vector<8x64xbf16>
    %c0_69 = arith.constant 0 : index
    %c0_70 = arith.constant 0 : index
    %c0_71 = arith.constant 0 : index
    %168 = vector.load %arg14[%c0_69, %c0_70, %c0_71] : memref<1x64x32xbf16, #tpu.memory_space<vmem>>, vector<1x64x32xbf16>
    %169 = vector.shape_cast %168 : vector<1x64x32xbf16> to vector<64x32xbf16>
    %cst_72 = arith.constant dense<0.000000e+00> : vector<8x32xf32>
    %170 = tpu.matmul %167, %169, %cst_72 {dimension_numbers = #tpu.dot_dimension_numbers<[1], [0], [0], [1], [0, 0, 1, 1], [], []>} : vector<8x64xbf16>, vector<64x32xbf16>, vector<8x32xf32> -> vector<8x32xf32>
    %c0_73 = arith.constant 0 : index
    %c0_74 = arith.constant 0 : index
    %c0_75 = arith.constant 0 : index
    %171 = vector.load %arg15[%c0_73, %c0_74, %c0_75] : memref<1x1x32xf32, #tpu.memory_space<vmem>>, vector<1x1x32xf32>
    %172 = vector.shape_cast %171 : vector<1x1x32xf32> to vector<1x32xf32>
    %173 = vector.broadcast %172 : vector<1x32xf32> to vector<8x32xf32>
    %174 = arith.addf %170, %173 : vector<8x32xf32>
    %175 = vector.shape_cast %174 : vector<8x32xf32> to vector<1x8x32xf32>
    %176 = arith.addf %127, %175 : vector<1x8x32xf32>
    %c0_76 = arith.constant 0 : index
    %c0_77 = arith.constant 0 : index
    %c0_78 = arith.constant 0 : index
    %177 = vector.load %arg17[%c0_76, %c0_77, %c0_78] : memref<1x8x32xf32, #tpu.memory_space<vmem>>, vector<1x8x32xf32>
    tpu.vector_store %arg17[%c0_76, %c0_77, %c0_78], %176 {strides = array<i32>} : memref<1x8x32xf32, #tpu.memory_space<vmem>>, vector<1x8x32xf32>,
    %c1_i32 = arith.constant 1 : i32
    %178 = arith.cmpi eq, %arg1, %c1_i32 : i32
    %179 = arith.extui %178 : i1 to i32
    %c0_i32_79 = arith.constant 0 : i32
    %180 = arith.cmpi ne, %179, %c0_i32_79 : i32
    scf.if %180 {
      %c0_80 = arith.constant 0 : index
      %c0_81 = arith.constant 0 : index
      %c0_82 = arith.constant 0 : index
      %181 = vector.load %arg16[%c0_80, %c0_81, %c0_82] : memref<1x8x32xf32, #tpu.memory_space<vmem>>, vector<1x8x32xf32>
      tpu.vector_store %arg16[%c0_80, %c0_81, %c0_82], %176 {strides = array<i32>} : memref<1x8x32xf32, #tpu.memory_space<vmem>>, vector<1x8x32xf32>,
    } else {
    }
    return
  }
  func.func @transform_0(%arg0: i32, %arg1: i32) -> (i32, i32, i32) {
    %c0_i32 = arith.constant 0 : i32
    %c0_i32_0 = arith.constant 0 : i32
    %c0_i32_1 = arith.constant 0 : i32
    return %arg0, %c0_i32, %c0_i32_0 : i32, i32, i32
  }
  func.func @transform_1(%arg0: i32, %arg1: i32) -> (i32, i32, i32) {
    %c0_i32 = arith.constant 0 : i32
    %c0_i32_0 = arith.constant 0 : i32
    %c0_i32_1 = arith.constant 0 : i32
    return %arg1, %c0_i32, %c0_i32_0 : i32, i32, i32
  }
  func.func @transform_2(%arg0: i32, %arg1: i32) -> (i32, i32, i32) {
    %c0_i32 = arith.constant 0 : i32
    %c0_i32_0 = arith.constant 0 : i32
    %c0_i32_1 = arith.constant 0 : i32
    return %arg1, %c0_i32, %c0_i32_0 : i32, i32, i32
  }
  func.func @transform_3(%arg0: i32, %arg1: i32) -> (i32, i32, i32, i32) {
    %c0_i32 = arith.constant 0 : i32
    %c0_i32_0 = arith.constant 0 : i32
    %c0_i32_1 = arith.constant 0 : i32
    %c0_i32_2 = arith.constant 0 : i32
    return %arg1, %c0_i32, %c0_i32_0, %c0_i32_1 : i32, i32, i32, i32
  }
  func.func @transform_4(%arg0: i32, %arg1: i32) -> (i32, i32, i32, i32) {
    %c0_i32 = arith.constant 0 : i32
    %c0_i32_0 = arith.constant 0 : i32
    %c0_i32_1 = arith.constant 0 : i32
    %c0_i32_2 = arith.constant 0 : i32
    return %arg1, %c0_i32, %c0_i32_0, %c0_i32_1 : i32, i32, i32, i32
  }
  func.func @transform_5(%arg0: i32, %arg1: i32) -> (i32, i32, i32, i32) {
    %c0_i32 = arith.constant 0 : i32
    %c0_i32_0 = arith.constant 0 : i32
    %c0_i32_1 = arith.constant 0 : i32
    %c0_i32_2 = arith.constant 0 : i32
    return %arg1, %c0_i32, %c0_i32_0, %c0_i32_1 : i32, i32, i32, i32
  }
  func.func @transform_6(%arg0: i32, %arg1: i32) -> (i32, i32, i32, i32) {
    %c0_i32 = arith.constant 0 : i32
    %c0_i32_0 = arith.constant 0 : i32
    %c0_i32_1 = arith.constant 0 : i32
    %c0_i32_2 = arith.constant 0 : i32
    return %arg1, %c0_i32, %c0_i32_0, %c0_i32_1 : i32, i32, i32, i32
  }
  func.func @transform_7(%arg0: i32, %arg1: i32) -> (i32, i32, i32) {
    %c0_i32 = arith.constant 0 : i32
    %c0_i32_0 = arith.constant 0 : i32
    %c0_i32_1 = arith.constant 0 : i32
    return %arg1, %c0_i32, %c0_i32_0 : i32, i32, i32
  }
  func.func @transform_8(%arg0: i32, %arg1: i32) -> (i32, i32, i32) {
    %c0_i32 = arith.constant 0 : i32
    %c0_i32_0 = arith.constant 0 : i32
    %c0_i32_1 = arith.constant 0 : i32
    return %arg1, %c0_i32, %c0_i32_0 : i32, i32, i32
  }
  func.func @transform_9(%arg0: i32, %arg1: i32) -> (i32, i32, i32) {
    %c0_i32 = arith.constant 0 : i32
    %c0_i32_0 = arith.constant 0 : i32
    %c0_i32_1 = arith.constant 0 : i32
    return %arg1, %c0_i32, %c0_i32_0 : i32, i32, i32
  }
  func.func @transform_10(%arg0: i32, %arg1: i32) -> (i32, i32, i32) {
    %c0_i32 = arith.constant 0 : i32
    %c0_i32_0 = arith.constant 0 : i32
    %c0_i32_1 = arith.constant 0 : i32
    return %arg1, %c0_i32, %c0_i32_0 : i32, i32, i32
  }
  func.func @transform_11(%arg0: i32, %arg1: i32) -> (i32, i32, i32) {
    %c0_i32 = arith.constant 0 : i32
    %c0_i32_0 = arith.constant 0 : i32
    %c0_i32_1 = arith.constant 0 : i32
    return %arg1, %c0_i32, %c0_i32_0 : i32, i32, i32
  }
  func.func @transform_12(%arg0: i32, %arg1: i32) -> (i32, i32, i32) {
    %c0_i32 = arith.constant 0 : i32
    %c0_i32_0 = arith.constant 0 : i32
    %c0_i32_1 = arith.constant 0 : i32
    return %arg1, %c0_i32, %c0_i32_0 : i32, i32, i32
  }
  func.func @transform_13(%arg0: i32, %arg1: i32) -> (i32, i32, i32) {
    %c0_i32 = arith.constant 0 : i32
    %c0_i32_0 = arith.constant 0 : i32
    %c0_i32_1 = arith.constant 0 : i32
    return %arg1, %c0_i32, %c0_i32_0 : i32, i32, i32
  }
  func.func @transform_14(%arg0: i32, %arg1: i32) -> (i32, i32, i32) {
    %c0_i32 = arith.constant 0 : i32
    %c0_i32_0 = arith.constant 0 : i32
    %c0_i32_1 = arith.constant 0 : i32
    return %arg0, %c0_i32, %c0_i32_0 : i32, i32, i32
  }
}

</mosaic_0001>

<llo_original>
// kernel: tpu_custom_call.1
$region0: #{tpu_custom_call.1}
  #allocation0 [shape = 'u32[]', space=smem, size = 0x4, offset = 0x4, fixed_abs, tag = 'smem constant byte address 0x4 - core index']
  #allocation1 [shape = 'u32[72,128]{1,0:T(1,128)}', space=vmem, size = 0x9000, scoped, tag = 'internal scratch']
  #allocation2 [shape = 'f32[1,8,32]{2,1,0:T(8,128)}', space=vmem, size = 0x1000, scoped, tag = 'scratch operand']
  %s0 = inlined_call_operand.hbm [shape: f32[2,8,32], index: 0, kind: input, shape index: {}, may-alias: {0,14}]
  %s1 = inlined_call_operand.vmem [shape: f32[2,1,32], index: 1, kind: input, shape index: {}]
  %s2 = inlined_call_operand.vmem [shape: f32[2,1,32], index: 2, kind: input, shape index: {}]
  %s3 = inlined_call_operand.vmem [shape: bf16[2,4,32,8], index: 3, kind: input, shape index: {}]
  %s4 = inlined_call_operand.vmem [shape: bf16[2,4,32,8], index: 4, kind: input, shape index: {}]
  %s5 = inlined_call_operand.vmem [shape: bf16[2,4,32,8], index: 5, kind: input, shape index: {}]
  %s6 = inlined_call_operand.vmem [shape: bf16[2,4,8,32], index: 6, kind: input, shape index: {}]
  %s7 = inlined_call_operand.vmem [shape: f32[2,1,32], index: 7, kind: input, shape index: {}]
  %s8 = inlined_call_operand.vmem [shape: f32[2,1,32], index: 8, kind: input, shape index: {}]
  %s9 = inlined_call_operand.vmem [shape: f32[2,1,32], index: 9, kind: input, shape index: {}]
  %s10 = inlined_call_operand.vmem [shape: bf16[2,32,64], index: 10, kind: input, shape index: {}]
  %s11 = inlined_call_operand.vmem [shape: f32[2,1,64], index: 11, kind: input, shape index: {}]
  %s12 = inlined_call_operand.vmem [shape: bf16[2,64,32], index: 12, kind: input, shape index: {}]
  %s13 = inlined_call_operand.vmem [shape: f32[2,1,32], index: 13, kind: input, shape index: {}]
  %s14 = inlined_call_operand.hbm [shape: f32[2,8,32], index: 14, kind: output, shape index: {}, may-alias: {0,14}]
  %s15 = sld [smem:[#allocation0]]
  $region101: #{tpu_custom_call.1} parent=0
    _
  %s17 = ssub.s32 1, %s15
  %s18 = scalar_select 0, %s17, %s15
  $region1: #{tpu_custom_call.1} parent=0
    #allocation3 [shape = 'u8[8192]{0}', space=vmem, size = 0x2000, scoped, tag = 'input window, operand 0']
    #allocation4 [shape = 's32[2]{0}', space=sflag, size = 0x8, scoped, tag = 'scoped memory for tpu_custom_call.1']
    #allocation5 [shape = 's32[2]{0}', space=sflag, size = 0x8, scoped, tag = 'scoped memory for tpu_custom_call.1']
    #allocation6 [shape = 'u8[8192]{0}', space=vmem, size = 0x2000, scoped, tag = 'output window, operand 0']
    %19 = vsyncpa [#allocation4], 0
    %s20 = scalar_lea.sflag [#allocation4], 1
    %21 = vsyncpa %s20, 0
    %22 = vsyncpa [#allocation5], 0
    %s23 = scalar_lea.sflag [#allocation5], 1
    %24 = vsyncpa %s23, 0
    loop: start=0, step=1, limit=6
    $region2: #{tpu_custom_call.1} parent=1 // loop_pre_header
      _
    $region3: #{tpu_custom_call.1} parent=1 // loop_header
      %s26 = sphi 0, %s30
      %p27 = scmp.ge.s32.totalorder %s26, 6
      %s33 = sphi 0, %s45
      %s34 = sphi 0, %s41
      %s35 = sphi 0, %s33
      %s36 = sphi 0, %s34
      %s37 = sphi 0, %s35
      %s38 = sphi 0, %s36
      %s48 = sphi 0, %s50
      %s51 = sphi 0, %s48
      %s52 = sphi 0, %s51
      %s68 = sphi 0, %s52
      %s74 = sphi 0, %s76
      %s77 = sphi 0, %s74
      %s78 = sphi 0, %s77
      %s94 = sphi 0, %s78
      %s100 = sphi 0, %s102
      %s103 = sphi 0, %s100
      %s104 = sphi 0, %s103
      %s120 = sphi 0, %s104
      %s126 = sphi 0, %s128
      %s129 = sphi 0, %s126
      %s130 = sphi 0, %s129
      %s146 = sphi 0, %s130
      %s152 = sphi 0, %s154
      %s155 = sphi 0, %s152
      %s156 = sphi 0, %s155
      %s172 = sphi 0, %s156
      %s178 = sphi 0, %s180
      %s181 = sphi 0, %s178
      %s182 = sphi 0, %s181
      %s198 = sphi 0, %s182
      %s204 = sphi 0, %s206
      %s207 = sphi 0, %s204
      %s208 = sphi 0, %s207
      %s224 = sphi 0, %s208
      %s230 = sphi 0, %s232
      %s233 = sphi 0, %s230
      %s234 = sphi 0, %s233
      %s250 = sphi 0, %s234
      %s256 = sphi 0, %s258
      %s259 = sphi 0, %s256
      %s260 = sphi 0, %s259
      %s276 = sphi 0, %s260
      %s282 = sphi 0, %s284
      %s285 = sphi 0, %s282
      %s286 = sphi 0, %s285
      %s302 = sphi 0, %s286
      %s308 = sphi 0, %s310
      %s311 = sphi 0, %s308
      %s312 = sphi 0, %s311
      %s328 = sphi 0, %s312
      %s334 = sphi 0, %s336
      %s337 = sphi 0, %s334
      %s338 = sphi 0, %s337
      %s354 = sphi 0, %s338
      %s360 = sphi 0, %s362
      %s363 = sphi 0, %s360
      %s364 = sphi 0, %s363
      %s380 = sphi 0, %s364
      %s386 = sphi 0, %s388
      %s389 = sphi 0, %s386
      %s390 = sphi 0, %s389
      %s406 = sphi 0, %s390
      %s412 = sphi 0, %s414
      %s415 = sphi 0, %s412
      %s416 = sphi 0, %s415
      %s432 = sphi 0, %s416
    $region4: #{tpu_custom_call.1} parent=1 // loop_header_branch
      %29 = sbr.rel (%p27) target = $region8
    $region5: #{tpu_custom_call.1} parent=1 // loop_body
      %s31 = ssub.s32 %s26, 1
      %s32 = ssub.s32 %s26, 2
      %s39 = sadd.s32 1, %s34
      %p40 = scmp.ge.s32.totalorder %s39, 2
      %s41 = scalar_select %p40, 0, %s39
      %s42 = sadd.s32 1, %s33
      %s43 = scalar_select %p40, %s42, %s33
      %p44 = scmp.ge.s32.totalorder %s43, 2
      %s45 = scalar_select %p44, 0, %s43
      %s46 = ssub.s32 %s33, %s45
      %p47 = scmp.eq.s32.totalorder %s46, 0
      %s49 = sadd.s32 %s48, 1
      %s50 = scalar_select %p47, %s48, %s49
      %p53 = pneg %p47
      %p54 = scmp.eq.s32.totalorder %s26, 3
      %p55 = por %p53, %p54
      %p56 = scmp.ne.s32.totalorder %s48, %s51
      %p57 = scmp.eq.s32.totalorder %s26, 0
      %p58 = por %p56, %p57
      %p59 = scmp.ne.s32.totalorder %s48, %s51
      %p60 = scmp.eq.s32.totalorder %s31, 3
      %p61 = por %p59, %p60
      %p62 = scmp.ne.s32.totalorder %s51, %s52
      %p63 = scmp.eq.s32.totalorder %s31, 0
      %p64 = por %p62, %p63
      %p65 = scmp.ne.s32.totalorder %s51, %s52
      %p66 = scmp.eq.s32.totalorder %s32, 3
      %p67 = por %p65, %p66
      %p69 = scmp.ne.s32.totalorder %s52, %s68
      %p70 = scmp.eq.s32.totalorder %s32, 0
      %p71 = por %p69, %p70
      %s72 = ssub.s32 %s34, %s41
      %p73 = scmp.eq.s32.totalorder %s72, 0
      %s75 = sadd.s32 %s74, 1
      %s76 = scalar_select %p73, %s74, %s75
      %p79 = pneg %p73
      %p80 = scmp.eq.s32.totalorder %s26, 3
      %p81 = por %p79, %p80
      %p82 = scmp.ne.s32.totalorder %s74, %s77
      %p83 = scmp.eq.s32.totalorder %s26, 0
      %p84 = por %p82, %p83
      %p85 = scmp.ne.s32.totalorder %s74, %s77
      %p86 = scmp.eq.s32.totalorder %s31, 3
      %p87 = por %p85, %p86
      %p88 = scmp.ne.s32.totalorder %s77, %s78
      %p89 = scmp.eq.s32.totalorder %s31, 0
      %p90 = por %p88, %p89
      %p91 = scmp.ne.s32.totalorder %s77, %s78
      %p92 = scmp.eq.s32.totalorder %s32, 3
      %p93 = por %p91, %p92
      %p95 = scmp.ne.s32.totalorder %s78, %s94
      %p96 = scmp.eq.s32.totalorder %s32, 0
      %p97 = por %p95, %p96
      %s98 = ssub.s32 %s34, %s41
      %p99 = scmp.eq.s32.totalorder %s98, 0
      %s101 = sadd.s32 %s100, 1
      %s102 = scalar_select %p99, %s100, %s101
      %p105 = pneg %p99
      %p106 = scmp.eq.s32.totalorder %s26, 3
      %p107 = por %p105, %p106
      %p108 = scmp.ne.s32.totalorder %s100, %s103
      %p109 = scmp.eq.s32.totalorder %s26, 0
      %p110 = por %p108, %p109
      %p111 = scmp.ne.s32.totalorder %s100, %s103
      %p112 = scmp.eq.s32.totalorder %s31, 3
      %p113 = por %p111, %p112
      %p114 = scmp.ne.s32.totalorder %s103, %s104
      %p115 = scmp.eq.s32.totalorder %s31, 0
      %p116 = por %p114, %p115
      %p117 = scmp.ne.s32.totalorder %s103, %s104
      %p118 = scmp.eq.s32.totalorder %s32, 3
      %p119 = por %p117, %p118
      %p121 = scmp.ne.s32.totalorder %s104, %s120
      %p122 = scmp.eq.s32.totalorder %s32, 0
      %p123 = por %p121, %p122
      %s124 = ssub.s32 %s34, %s41
      %p125 = scmp.eq.s32.totalorder %s124, 0
      %s127 = sadd.s32 %s126, 1
      %s128 = scalar_select %p125, %s126, %s127
      %p131 = pneg %p125
      %p132 = scmp.eq.s32.totalorder %s26, 3
      %p133 = por %p131, %p132
      %p134 = scmp.ne.s32.totalorder %s126, %s129
      %p135 = scmp.eq.s32.totalorder %s26, 0
      %p136 = por %p134, %p135
      %p137 = scmp.ne.s32.totalorder %s126, %s129
      %p138 = scmp.eq.s32.totalorder %s31, 3
      %p139 = por %p137, %p138
      %p140 = scmp.ne.s32.totalorder %s129, %s130
      %p141 = scmp.eq.s32.totalorder %s31, 0
      %p142 = por %p140, %p141
      %p143 = scmp.ne.s32.totalorder %s129, %s130
      %p144 = scmp.eq.s32.totalorder %s32, 3
      %p145 = por %p143, %p144
      %p147 = scmp.ne.s32.totalorder %s130, %s146
      %p148 = scmp.eq.s32.totalorder %s32, 0
      %p149 = por %p147, %p148
      %s150 = ssub.s32 %s34, %s41
      %p151 = scmp.eq.s32.totalorder %s150, 0
      %s153 = sadd.s32 %s152, 1
      %s154 = scalar_select %p151, %s152, %s153
      %p157 = pneg %p151
      %p158 = scmp.eq.s32.totalorder %s26, 3
      %p159 = por %p157, %p158
      %p160 = scmp.ne.s32.totalorder %s152, %s155
      %p161 = scmp.eq.s32.totalorder %s26, 0
      %p162 = por %p160, %p161
      %p163 = scmp.ne.s32.totalorder %s152, %s155
      %p164 = scmp.eq.s32.totalorder %s31, 3
      %p165 = por %p163, %p164
      %p166 = scmp.ne.s32.totalorder %s155, %s156
      %p167 = scmp.eq.s32.totalorder %s31, 0
      %p168 = por %p166, %p167
      %p169 = scmp.ne.s32.totalorder %s155, %s156
      %p170 = scmp.eq.s32.totalorder %s32, 3
      %p171 = por %p169, %p170
      %p173 = scmp.ne.s32.totalorder %s156, %s172
      %p174 = scmp.eq.s32.totalorder %s32, 0
      %p175 = por %p173, %p174
      %s176 = ssub.s32 %s34, %s41
      %p177 = scmp.eq.s32.totalorder %s176, 0
      %s179 = sadd.s32 %s178, 1
      %s180 = scalar_select %p177, %s178, %s179
      %p183 = pneg %p177
      %p184 = scmp.eq.s32.totalorder %s26, 3
      %p185 = por %p183, %p184
      %p186 = scmp.ne.s32.totalorder %s178, %s181
      %p187 = scmp.eq.s32.totalorder %s26, 0
      %p188 = por %p186, %p187
      %p189 = scmp.ne.s32.totalorder %s178, %s181
      %p190 = scmp.eq.s32.totalorder %s31, 3
      %p191 = por %p189, %p190
      %p192 = scmp.ne.s32.totalorder %s181, %s182
      %p193 = scmp.eq.s32.totalorder %s31, 0
      %p194 = por %p192, %p193
      %p195 = scmp.ne.s32.totalorder %s181, %s182
      %p196 = scmp.eq.s32.totalorder %s32, 3
      %p197 = por %p195, %p196
      %p199 = scmp.ne.s32.totalorder %s182, %s198
      %p200 = scmp.eq.s32.totalorder %s32, 0
      %p201 = por %p199, %p200
      %s202 = ssub.s32 %s34, %s41
      %p203 = scmp.eq.s32.totalorder %s202, 0
      %s205 = sadd.s32 %s204, 1
      %s206 = scalar_select %p203, %s204, %s205
      %p209 = pneg %p203
      %p210 = scmp.eq.s32.totalorder %s26, 3
      %p211 = por %p209, %p210
      %p212 = scmp.ne.s32.totalorder %s204, %s207
      %p213 = scmp.eq.s32.totalorder %s26, 0
      %p214 = por %p212, %p213
      %p215 = scmp.ne.s32.totalorder %s204, %s207
      %p216 = scmp.eq.s32.totalorder %s31, 3
      %p217 = por %p215, %p216
      %p218 = scmp.ne.s32.totalorder %s207, %s208
      %p219 = scmp.eq.s32.totalorder %s31, 0
      %p220 = por %p218, %p219
      %p221 = scmp.ne.s32.totalorder %s207, %s208
      %p222 = scmp.eq.s32.totalorder %s32, 3
      %p223 = por %p221, %p222
      %p225 = scmp.ne.s32.totalorder %s208, %s224
      %p226 = scmp.eq.s32.totalorder %s32, 0
      %p227 = por %p225, %p226
      %s228 = ssub.s32 %s34, %s41
      %p229 = scmp.eq.s32.totalorder %s228, 0
      %s231 = sadd.s32 %s230, 1
      %s232 = scalar_select %p229, %s230, %s231
      %p235 = pneg %p229
      %p236 = scmp.eq.s32.totalorder %s26, 3
      %p237 = por %p235, %p236
      %p238 = scmp.ne.s32.totalorder %s230, %s233
      %p239 = scmp.eq.s32.totalorder %s26, 0
      %p240 = por %p238, %p239
      %p241 = scmp.ne.s32.totalorder %s230, %s233
      %p242 = scmp.eq.s32.totalorder %s31, 3
      %p243 = por %p241, %p242
      %p244 = scmp.ne.s32.totalorder %s233, %s234
      %p245 = scmp.eq.s32.totalorder %s31, 0
      %p246 = por %p244, %p245
      %p247 = scmp.ne.s32.totalorder %s233, %s234
      %p248 = scmp.eq.s32.totalorder %s32, 3
      %p249 = por %p247, %p248
      %p251 = scmp.ne.s32.totalorder %s234, %s250
      %p252 = scmp.eq.s32.totalorder %s32, 0
      %p253 = por %p251, %p252
      %s254 = ssub.s32 %s34, %s41
      %p255 = scmp.eq.s32.totalorder %s254, 0
      %s257 = sadd.s32 %s256, 1
      %s258 = scalar_select %p255, %s256, %s257
      %p261 = pneg %p255
      %p262 = scmp.eq.s32.totalorder %s26, 3
      %p263 = por %p261, %p262
      %p264 = scmp.ne.s32.totalorder %s256, %s259
      %p265 = scmp.eq.s32.totalorder %s26, 0
      %p266 = por %p264, %p265
      %p267 = scmp.ne.s32.totalorder %s256, %s259
      %p268 = scmp.eq.s32.totalorder %s31, 3
      %p269 = por %p267, %p268
      %p270 = scmp.ne.s32.totalorder %s259, %s260
      %p271 = scmp.eq.s32.totalorder %s31, 0
      %p272 = por %p270, %p271
      %p273 = scmp.ne.s32.totalorder %s259, %s260
      %p274 = scmp.eq.s32.totalorder %s32, 3
      %p275 = por %p273, %p274
      %p277 = scmp.ne.s32.totalorder %s260, %s276
      %p278 = scmp.eq.s32.totalorder %s32, 0
      %p279 = por %p277, %p278
      %s280 = ssub.s32 %s34, %s41
      %p281 = scmp.eq.s32.totalorder %s280, 0
      %s283 = sadd.s32 %s282, 1
      %s284 = scalar_select %p281, %s282, %s283
      %p287 = pneg %p281
      %p288 = scmp.eq.s32.totalorder %s26, 3
      %p289 = por %p287, %p288
      %p290 = scmp.ne.s32.totalorder %s282, %s285
      %p291 = scmp.eq.s32.totalorder %s26, 0
      %p292 = por %p290, %p291
      %p293 = scmp.ne.s32.totalorder %s282, %s285
      %p294 = scmp.eq.s32.totalorder %s31, 3
      %p295 = por %p293, %p294
      %p296 = scmp.ne.s32.totalorder %s285, %s286
      %p297 = scmp.eq.s32.totalorder %s31, 0
      %p298 = por %p296, %p297
      %p299 = scmp.ne.s32.totalorder %s285, %s286
      %p300 = scmp.eq.s32.totalorder %s32, 3
      %p301 = por %p299, %p300
      %p303 = scmp.ne.s32.totalorder %s286, %s302
      %p304 = scmp.eq.s32.totalorder %s32, 0
      %p305 = por %p303, %p304
      %s306 = ssub.s32 %s34, %s41
      %p307 = scmp.eq.s32.totalorder %s306, 0
      %s309 = sadd.s32 %s308, 1
      %s310 = scalar_select %p307, %s308, %s309
      %p313 = pneg %p307
      %p314 = scmp.eq.s32.totalorder %s26, 3
      %p315 = por %p313, %p314
      %p316 = scmp.ne.s32.totalorder %s308, %s311
      %p317 = scmp.eq.s32.totalorder %s26, 0
      %p318 = por %p316, %p317
      %p319 = scmp.ne.s32.totalorder %s308, %s311
      %p320 = scmp.eq.s32.totalorder %s31, 3
      %p321 = por %p319, %p320
      %p322 = scmp.ne.s32.totalorder %s311, %s312
      %p323 = scmp.eq.s32.totalorder %s31, 0
      %p324 = por %p322, %p323
      %p325 = scmp.ne.s32.totalorder %s311, %s312
      %p326 = scmp.eq.s32.totalorder %s32, 3
      %p327 = por %p325, %p326
      %p329 = scmp.ne.s32.totalorder %s312, %s328
      %p330 = scmp.eq.s32.totalorder %s32, 0
      %p331 = por %p329, %p330
      %s332 = ssub.s32 %s34, %s41
      %p333 = scmp.eq.s32.totalorder %s332, 0
      %s335 = sadd.s32 %s334, 1
      %s336 = scalar_select %p333, %s334, %s335
      %p339 = pneg %p333
      %p340 = scmp.eq.s32.totalorder %s26, 3
      %p341 = por %p339, %p340
      %p342 = scmp.ne.s32.totalorder %s334, %s337
      %p343 = scmp.eq.s32.totalorder %s26, 0
      %p344 = por %p342, %p343
      %p345 = scmp.ne.s32.totalorder %s334, %s337
      %p346 = scmp.eq.s32.totalorder %s31, 3
      %p347 = por %p345, %p346
      %p348 = scmp.ne.s32.totalorder %s337, %s338
      %p349 = scmp.eq.s32.totalorder %s31, 0
      %p350 = por %p348, %p349
      %p351 = scmp.ne.s32.totalorder %s337, %s338
      %p352 = scmp.eq.s32.totalorder %s32, 3
      %p353 = por %p351, %p352
      %p355 = scmp.ne.s32.totalorder %s338, %s354
      %p356 = scmp.eq.s32.totalorder %s32, 0
      %p357 = por %p355, %p356
      %s358 = ssub.s32 %s34, %s41
      %p359 = scmp.eq.s32.totalorder %s358, 0
      %s361 = sadd.s32 %s360, 1
      %s362 = scalar_select %p359, %s360, %s361
      %p365 = pneg %p359
      %p366 = scmp.eq.s32.totalorder %s26, 3
      %p367 = por %p365, %p366
      %p368 = scmp.ne.s32.totalorder %s360, %s363
      %p369 = scmp.eq.s32.totalorder %s26, 0
      %p370 = por %p368, %p369
      %p371 = scmp.ne.s32.totalorder %s360, %s363
      %p372 = scmp.eq.s32.totalorder %s31, 3
      %p373 = por %p371, %p372
      %p374 = scmp.ne.s32.totalorder %s363, %s364
      %p375 = scmp.eq.s32.totalorder %s31, 0
      %p376 = por %p374, %p375
      %p377 = scmp.ne.s32.totalorder %s363, %s364
      %p378 = scmp.eq.s32.totalorder %s32, 3
      %p379 = por %p377, %p378
      %p381 = scmp.ne.s32.totalorder %s364, %s380
      %p382 = scmp.eq.s32.totalorder %s32, 0
      %p383 = por %p381, %p382
      %s384 = ssub.s32 %s34, %s41
      %p385 = scmp.eq.s32.totalorder %s384, 0
      %s387 = sadd.s32 %s386, 1
      %s388 = scalar_select %p385, %s386, %s387
      %p391 = pneg %p385
      %p392 = scmp.eq.s32.totalorder %s26, 3
      %p393 = por %p391, %p392
      %p394 = scmp.ne.s32.totalorder %s386, %s389
      %p395 = scmp.eq.s32.totalorder %s26, 0
      %p396 = por %p394, %p395
      %p397 = scmp.ne.s32.totalorder %s386, %s389
      %p398 = scmp.eq.s32.totalorder %s31, 3
      %p399 = por %p397, %p398
      %p400 = scmp.ne.s32.totalorder %s389, %s390
      %p401 = scmp.eq.s32.totalorder %s31, 0
      %p402 = por %p400, %p401
      %p403 = scmp.ne.s32.totalorder %s389, %s390
      %p404 = scmp.eq.s32.totalorder %s32, 3
      %p405 = por %p403, %p404
      %p407 = scmp.ne.s32.totalorder %s390, %s406
      %p408 = scmp.eq.s32.totalorder %s32, 0
      %p409 = por %p407, %p408
      %s410 = ssub.s32 %s33, %s45
      %p411 = scmp.eq.s32.totalorder %s410, 0
      %s413 = sadd.s32 %s412, 1
      %s414 = scalar_select %p411, %s412, %s413
      %p417 = pneg %p411
      %p418 = scmp.eq.s32.totalorder %s26, 3
      %p419 = por %p417, %p418
      %p420 = scmp.ne.s32.totalorder %s412, %s415
      %p421 = scmp.eq.s32.totalorder %s26, 0
      %p422 = por %p420, %p421
      %p423 = scmp.ne.s32.totalorder %s412, %s415
      %p424 = scmp.eq.s32.totalorder %s31, 3
      %p425 = por %p423, %p424
      %p426 = scmp.ne.s32.totalorder %s415, %s416
      %p427 = scmp.eq.s32.totalorder %s31, 0
      %p428 = por %p426, %p427
      %p429 = scmp.ne.s32.totalorder %s415, %s416
      %p430 = scmp.eq.s32.totalorder %s32, 3
      %p431 = por %p429, %p430
      %p433 = scmp.ne.s32.totalorder %s416, %s432
      %p434 = scmp.eq.s32.totalorder %s32, 0
      %p435 = por %p433, %p434
      %p436 = scmp.le.s32.totalorder 1, %s26
      %p437 = scmp.lt.s32.totalorder %s26, 5
      %p438 = pnand %p436, %p437
      %p439 = pneg %p438
      // Predicated region
      $region9: #{tpu_custom_call.1} parent=5 // pred_check
        _
      $region10: #{tpu_custom_call.1} parent=5 // pred_check_branch
        %441 = sbr.rel (%p438) target = $region12
      $region11: #{tpu_custom_call.1} parent=5 // pred_region
        %s442 = ssub.s32 %s26, 1
      $region12: #{tpu_custom_call.1} parent=5 // pred_fallthru
        _
      %p443 = scmp.lt.s32.totalorder %s26, 4
      // Predicated region
      $region13: #{tpu_custom_call.1} parent=5 // pred_check
        %p444 = pneg %p443
      $region14: #{tpu_custom_call.1} parent=5 // pred_check_branch
        %446 = sbr.rel (%p444) target = $region16
      $region15: #{tpu_custom_call.1} parent=5 // pred_region
        // Predicated region
        $region17: #{tpu_custom_call.1} parent=15 // pred_check
          %p447 = pneg %p58
        $region18: #{tpu_custom_call.1} parent=15 // pred_check_branch
          %449 = sbr.rel (%p447) target = $region20
        $region19: #{tpu_custom_call.1} parent=15 // pred_region
          %s450 = sand.u32 %s48, 1
          %s451 = scalar_lea.sflag [#allocation4], %s450
          %s452 = sand.u32 %s48, 1
          %s453 = smul.addr %s452, 8
          %s454 = scalar_lea.vmem [#allocation3], %s453
          %456 = vsyncadd %s451, 0
          %s457 = smul.addr %s33, 8
          %s458 = scalar_lea.hbm %s0, %s457
          %s460 = sshll.u32 %s458, 4
          %s461 = int_to_ptr.hbm [resolvable:$true] %s460
          %s462 = sshll.u32 %s454, 4
          %s463 = int_to_ptr.vmem [resolvable:$true] %s462
          %465 = dma.hbm_to_vmem [thread:$0]  %s461, 128, %s463, %s451
        $region20: #{tpu_custom_call.1} parent=15 // pred_fallthru
          _
        // Predicated region
        $region21: #{tpu_custom_call.1} parent=15 // pred_check
          %p466 = pneg %p84
        $region22: #{tpu_custom_call.1} parent=15 // pred_check_branch
          %468 = sbr.rel (%p466) target = $region24
        $region23: #{tpu_custom_call.1} parent=15 // pred_region
          %p469 = scmp.lt.s32.totalorder %s34, 1
          %s470 = scalar_select %p469, %s34, 1
          %s471 = scalar_lea.vmem %s1, %s470
        $region24: #{tpu_custom_call.1} parent=15 // pred_fallthru
          _
        // Predicated region
        $region25: #{tpu_custom_call.1} parent=15 // pred_check
          %p472 = pneg %p110
        $region26: #{tpu_custom_call.1} parent=15 // pred_check_branch
          %474 = sbr.rel (%p472) target = $region28
        $region27: #{tpu_custom_call.1} parent=15 // pred_region
          %p475 = scmp.lt.s32.totalorder %s34, 1
          %s476 = scalar_select %p475, %s34, 1
          %s477 = scalar_lea.vmem %s2, %s476
        $region28: #{tpu_custom_call.1} parent=15 // pred_fallthru
          _
        // Predicated region
        $region29: #{tpu_custom_call.1} parent=15 // pred_check
          %p478 = pneg %p136
        $region30: #{tpu_custom_call.1} parent=15 // pred_check_branch
          %480 = sbr.rel (%p478) target = $region32
        $region31: #{tpu_custom_call.1} parent=15 // pred_region
          %p481 = scmp.lt.s32.totalorder %s34, 1
          %s482 = scalar_select %p481, %s34, 1
          %s483 = smul.addr %s482, 16
          %s484 = smul.addr %s483, 4
          %s485 = scalar_lea.vmem %s3, %s484
        $region32: #{tpu_custom_call.1} parent=15 // pred_fallthru
          _
        // Predicated region
        $region33: #{tpu_custom_call.1} parent=15 // pred_check
          %p486 = pneg %p162
        $region34: #{tpu_custom_call.1} parent=15 // pred_check_branch
          %488 = sbr.rel (%p486) target = $region36
        $region35: #{tpu_custom_call.1} parent=15 // pred_region
          %p489 = scmp.lt.s32.totalorder %s34, 1
          %s490 = scalar_select %p489, %s34, 1
          %s491 = smul.addr %s490, 16
          %s492 = smul.addr %s491, 4
          %s493 = scalar_lea.vmem %s4, %s492
        $region36: #{tpu_custom_call.1} parent=15 // pred_fallthru
          _
        // Predicated region
        $region37: #{tpu_custom_call.1} parent=15 // pred_check
          %p494 = pneg %p188
        $region38: #{tpu_custom_call.1} parent=15 // pred_check_branch
          %496 = sbr.rel (%p494) target = $region40
        $region39: #{tpu_custom_call.1} parent=15 // pred_region
          %p497 = scmp.lt.s32.totalorder %s34, 1
          %s498 = scalar_select %p497, %s34, 1
          %s499 = smul.addr %s498, 16
          %s500 = smul.addr %s499, 4
          %s501 = scalar_lea.vmem %s5, %s500
        $region40: #{tpu_custom_call.1} parent=15 // pred_fallthru
          _
        // Predicated region
        $region41: #{tpu_custom_call.1} parent=15 // pred_check
          %p502 = pneg %p214
        $region42: #{tpu_custom_call.1} parent=15 // pred_check_branch
          %504 = sbr.rel (%p502) target = $region44
        $region43: #{tpu_custom_call.1} parent=15 // pred_region
          %p505 = scmp.lt.s32.totalorder %s34, 1
          %s506 = scalar_select %p505, %s34, 1
          %s507 = smul.addr %s506, 4
          %s508 = smul.addr %s507, 4
          %s509 = scalar_lea.vmem %s6, %s508
        $region44: #{tpu_custom_call.1} parent=15 // pred_fallthru
          _
        // Predicated region
        $region45: #{tpu_custom_call.1} parent=15 // pred_check
          %p510 = pneg %p240
        $region46: #{tpu_custom_call.1} parent=15 // pred_check_branch
          %512 = sbr.rel (%p510) target = $region48
        $region47: #{tpu_custom_call.1} parent=15 // pred_region
          %p513 = scmp.lt.s32.totalorder %s34, 1
          %s514 = scalar_select %p513, %s34, 1
          %s515 = scalar_lea.vmem %s7, %s514
        $region48: #{tpu_custom_call.1} parent=15 // pred_fallthru
          _
        // Predicated region
        $region49: #{tpu_custom_call.1} parent=15 // pred_check
          %p516 = pneg %p266
        $region50: #{tpu_custom_call.1} parent=15 // pred_check_branch
          %518 = sbr.rel (%p516) target = $region52
        $region51: #{tpu_custom_call.1} parent=15 // pred_region
          %p519 = scmp.lt.s32.totalorder %s34, 1
          %s520 = scalar_select %p519, %s34, 1
          %s521 = scalar_lea.vmem %s8, %s520
        $region52: #{tpu_custom_call.1} parent=15 // pred_fallthru
          _
        // Predicated region
        $region53: #{tpu_custom_call.1} parent=15 // pred_check
          %p522 = pneg %p292
        $region54: #{tpu_custom_call.1} parent=15 // pred_check_branch
          %524 = sbr.rel (%p522) target = $region56
        $region55: #{tpu_custom_call.1} parent=15 // pred_region
          %p525 = scmp.lt.s32.totalorder %s34, 1
          %s526 = scalar_select %p525, %s34, 1
          %s527 = scalar_lea.vmem %s9, %s526
        $region56: #{tpu_custom_call.1} parent=15 // pred_fallthru
          _
        // Predicated region
        $region57: #{tpu_custom_call.1} parent=15 // pred_check
          %p528 = pneg %p318
        $region58: #{tpu_custom_call.1} parent=15 // pred_check_branch
          %530 = sbr.rel (%p528) target = $region60
        $region59: #{tpu_custom_call.1} parent=15 // pred_region
          %p531 = scmp.lt.s32.totalorder %s34, 1
          %s532 = scalar_select %p531, %s34, 1
          %s533 = smul.addr %s532, 4
          %s534 = smul.addr %s533, 4
          %s535 = scalar_lea.vmem %s10, %s534
        $region60: #{tpu_custom_call.1} parent=15 // pred_fallthru
          _
        // Predicated region
        $region61: #{tpu_custom_call.1} parent=15 // pred_check
          %p536 = pneg %p344
        $region62: #{tpu_custom_call.1} parent=15 // pred_check_branch
          %538 = sbr.rel (%p536) target = $region64
        $region63: #{tpu_custom_call.1} parent=15 // pred_region
          %p539 = scmp.lt.s32.totalorder %s34, 1
          %s540 = scalar_select %p539, %s34, 1
          %s541 = scalar_lea.vmem %s11, %s540
        $region64: #{tpu_custom_call.1} parent=15 // pred_fallthru
          _
        // Predicated region
        $region65: #{tpu_custom_call.1} parent=15 // pred_check
          %p542 = pneg %p370
        $region66: #{tpu_custom_call.1} parent=15 // pred_check_branch
          %544 = sbr.rel (%p542) target = $region68
        $region67: #{tpu_custom_call.1} parent=15 // pred_region
          %p545 = scmp.lt.s32.totalorder %s34, 1
          %s546 = scalar_select %p545, %s34, 1
          %s547 = smul.addr %s546, 8
          %s548 = smul.addr %s547, 4
          %s549 = scalar_lea.vmem %s12, %s548
        $region68: #{tpu_custom_call.1} parent=15 // pred_fallthru
          _
        // Predicated region
        $region69: #{tpu_custom_call.1} parent=15 // pred_check
          %p550 = pneg %p396
        $region70: #{tpu_custom_call.1} parent=15 // pred_check_branch
          %552 = sbr.rel (%p550) target = $region72
        $region71: #{tpu_custom_call.1} parent=15 // pred_region
          %p553 = scmp.lt.s32.totalorder %s34, 1
          %s554 = scalar_select %p553, %s34, 1
          %s555 = scalar_lea.vmem %s13, %s554
        $region72: #{tpu_custom_call.1} parent=15 // pred_fallthru
          _
      $region16: #{tpu_custom_call.1} parent=5 // pred_fallthru
        _
      %p556 = scmp.le.s32.totalorder 1, %s26
      %p557 = scmp.lt.s32.totalorder %s26, 5
      %p558 = pnand %p556, %p557
      %p559 = pneg %p558
      // Predicated region
      $region73: #{tpu_custom_call.1} parent=5 // pred_check
        _
      $region74: #{tpu_custom_call.1} parent=5 // pred_check_branch
        %561 = sbr.rel (%p558) target = $region76
      $region75: #{tpu_custom_call.1} parent=5 // pred_region
        %s562 = ssub.s32 %s26, 1
        %s563 = sand.u32 %s51, 1
        %s564 = scalar_lea.sflag [#allocation4], %s563
        %s565 = sand.u32 %s51, 1
        %s566 = smul.addr %s565, 8
        %s567 = scalar_lea.vmem [#allocation3], %s566
        // Predicated region
        $region77: #{tpu_custom_call.1} parent=75 // pred_check
          %p568 = pneg %p64
        $region78: #{tpu_custom_call.1} parent=75 // pred_check_branch
          %570 = sbr.rel (%p568) target = $region80
        $region79: #{tpu_custom_call.1} parent=75 // pred_region
          %572 = dma.done %s564, 128
        $region80: #{tpu_custom_call.1} parent=75 // pred_fallthru
          _
        %s573 = sand.u32 %s51, 1
        %s574 = scalar_lea.sflag [#allocation4], %s573
        %s575 = sand.u32 %s51, 1
        %s576 = smul.addr %s575, 8
        %s577 = scalar_lea.vmem [#allocation3], %s576
        %p578 = pneg %p64
        %p579 = pneg %p61
        %p580 = scmp.lt.s32.totalorder %s36, 1
        %s581 = scalar_select %p580, %s36, 1
        %s582 = scalar_lea.vmem %s1, %s581
        %p583 = pneg %p90
        %p584 = pneg %p87
        %p585 = scmp.lt.s32.totalorder %s36, 1
        %s586 = scalar_select %p585, %s36, 1
        %s587 = scalar_lea.vmem %s2, %s586
        %p588 = pneg %p116
        %p589 = pneg %p113
        %p590 = scmp.lt.s32.totalorder %s36, 1
        %s591 = scalar_select %p590, %s36, 1
        %s592 = smul.addr %s591, 16
        %s593 = smul.addr %s592, 4
        %s594 = scalar_lea.vmem %s3, %s593
        %p595 = pneg %p142
        %p596 = pneg %p139
        %p597 = scmp.lt.s32.totalorder %s36, 1
        %s598 = scalar_select %p597, %s36, 1
        %s599 = smul.addr %s598, 16
        %s600 = smul.addr %s599, 4
        %s601 = scalar_lea.vmem %s4, %s600
        %p602 = pneg %p168
        %p603 = pneg %p165
        %p604 = scmp.lt.s32.totalorder %s36, 1
        %s605 = scalar_select %p604, %s36, 1
        %s606 = smul.addr %s605, 16
        %s607 = smul.addr %s606, 4
        %s608 = scalar_lea.vmem %s5, %s607
        %p609 = pneg %p194
        %p610 = pneg %p191
        %p611 = scmp.lt.s32.totalorder %s36, 1
        %s612 = scalar_select %p611, %s36, 1
        %s613 = smul.addr %s612, 4
        %s614 = smul.addr %s613, 4
        %s615 = scalar_lea.vmem %s6, %s614
        %p616 = pneg %p220
        %p617 = pneg %p217
        %p618 = scmp.lt.s32.totalorder %s36, 1
        %s619 = scalar_select %p618, %s36, 1
        %s620 = scalar_lea.vmem %s7, %s619
        %p621 = pneg %p246
        %p622 = pneg %p243
        %p623 = scmp.lt.s32.totalorder %s36, 1
        %s624 = scalar_select %p623, %s36, 1
        %s625 = scalar_lea.vmem %s8, %s624
        %p626 = pneg %p272
        %p627 = pneg %p269
        %p628 = scmp.lt.s32.totalorder %s36, 1
        %s629 = scalar_select %p628, %s36, 1
        %s630 = scalar_lea.vmem %s9, %s629
        %p631 = pneg %p298
        %p632 = pneg %p295
        %p633 = scmp.lt.s32.totalorder %s36, 1
        %s634 = scalar_select %p633, %s36, 1
        %s635 = smul.addr %s634, 4
        %s636 = smul.addr %s635, 4
        %s637 = scalar_lea.vmem %s10, %s636
        %p638 = pneg %p324
        %p639 = pneg %p321
        %p640 = scmp.lt.s32.totalorder %s36, 1
        %s641 = scalar_select %p640, %s36, 1
        %s642 = scalar_lea.vmem %s11, %s641
        %p643 = pneg %p350
        %p644 = pneg %p347
        %p645 = scmp.lt.s32.totalorder %s36, 1
        %s646 = scalar_select %p645, %s36, 1
        %s647 = smul.addr %s646, 8
        %s648 = smul.addr %s647, 4
        %s649 = scalar_lea.vmem %s12, %s648
        %p650 = pneg %p376
        %p651 = pneg %p373
        %p652 = scmp.lt.s32.totalorder %s36, 1
        %s653 = scalar_select %p652, %s36, 1
        %s654 = scalar_lea.vmem %s13, %s653
        %p655 = pneg %p402
        %p656 = pneg %p399
        %p657 = pneg %p428
        %p658 = pneg %p425
        %s659 = sand.u32 %s415, 1
        %s660 = scalar_lea.sflag [#allocation5], %s659
        %s661 = sand.u32 %s415, 1
        %s662 = smul.addr %s661, 8
        %s663 = scalar_lea.vmem [#allocation6], %s662
        %p664 = scmp.lt.s32.totalorder %s36, 1
        %s665 = scalar_select %p664, %s36, 1
        %s666 = scalar_lea.vmem %s1, %s665
        %p667 = scmp.lt.s32.totalorder %s36, 1
        %s668 = scalar_select %p667, %s36, 1
        %s669 = scalar_lea.vmem %s2, %s668
        %p670 = scmp.lt.s32.totalorder %s36, 1
        %s671 = scalar_select %p670, %s36, 1
        %s672 = smul.addr %s671, 16
        %s673 = smul.addr %s672, 4
        %s674 = scalar_lea.vmem %s3, %s673
        %p675 = scmp.lt.s32.totalorder %s36, 1
        %s676 = scalar_select %p675, %s36, 1
        %s677 = smul.addr %s676, 16
        %s678 = smul.addr %s677, 4
        %s679 = scalar_lea.vmem %s4, %s678
        %p680 = scmp.lt.s32.totalorder %s36, 1
        %s681 = scalar_select %p680, %s36, 1
        %s682 = smul.addr %s681, 16
        %s683 = smul.addr %s682, 4
        %s684 = scalar_lea.vmem %s5, %s683
        %p685 = scmp.lt.s32.totalorder %s36, 1
        %s686 = scalar_select %p685, %s36, 1
        %s687 = smul.addr %s686, 4
        %s688 = smul.addr %s687, 4
        %s689 = scalar_lea.vmem %s6, %s688
        %p690 = scmp.lt.s32.totalorder %s36, 1
        %s691 = scalar_select %p690, %s36, 1
        %s692 = scalar_lea.vmem %s7, %s691
        %p693 = scmp.lt.s32.totalorder %s36, 1
        %s694 = scalar_select %p693, %s36, 1
        %s695 = scalar_lea.vmem %s8, %s694
        %p696 = scmp.lt.s32.totalorder %s36, 1
        %s697 = scalar_select %p696, %s36, 1
        %s698 = scalar_lea.vmem %s9, %s697
        %p699 = scmp.lt.s32.totalorder %s36, 1
        %s700 = scalar_select %p699, %s36, 1
        %s701 = smul.addr %s700, 4
        %s702 = smul.addr %s701, 4
        %s703 = scalar_lea.vmem %s10, %s702
        %p704 = scmp.lt.s32.totalorder %s36, 1
        %s705 = scalar_select %p704, %s36, 1
        %s706 = scalar_lea.vmem %s11, %s705
        %p707 = scmp.lt.s32.totalorder %s36, 1
        %s708 = scalar_select %p707, %s36, 1
        %s709 = smul.addr %s708, 8
        %s710 = smul.addr %s709, 4
        %s711 = scalar_lea.vmem %s12, %s710
        %p712 = scmp.lt.s32.totalorder %s36, 1
        %s713 = scalar_select %p712, %s36, 1
        %s714 = scalar_lea.vmem %s13, %s713
        %p716 = scmp.eq.s32.totalorder %s36, 0
        // Predicated region
        $region81: #{tpu_custom_call.1} parent=75 // pred_check
          %p717 = pneg %p716
        $region82: #{tpu_custom_call.1} parent=75 // pred_check_branch
          %719 = sbr.rel (%p717) target = $region84
        $region83: #{tpu_custom_call.1} parent=75 // pred_region
          %v720 = vld [vmem:[%s567] sm:$0xff]
          %vm721 = vcmask 261120
          %722 = vst.msk [vmem:[#allocation2] sm:$0xff] %vm721, %v720
        $region84: #{tpu_custom_call.1} parent=75 // pred_fallthru
          _
        %v723 = vld [vmem:[#allocation2] sm:$0xff]
        %v724 = vld [vmem:[%s666] sm:$0x1]
        %v725 = vld [vmem:[%s669] sm:$0x1]
        %vm726 = vcmask 261120
        %v727 = vsel %vm726, %v723, 0.0
        %728 = vadd.xlane.f32.xlu0 %v727
        %v729 = vpop.xlane.xlu0 %728
        %v730 = vrcp.pop 32.0
        %v731 = vmul.f32 32.0, %v730
        %v732 = vsub.f32 1.0, %v731
        %v733 = vmul.f32 %v730, %v732
        %v734 = vadd.f32 %v730, %v733
        %vm735 = vweird.f32 %v730
        %v736 = vsel %vm735, %v730, %v734
        %v737 = vmul.f32 %v729, %v736
        %v738 = vmul.f32 %v723, %v723
        %v739 = vsel %vm726, %v738, 0.0
        %740 = vadd.xlane.f32.xlu0 %v739
        %v741 = vpop.xlane.xlu0 %740
        %v742 = vmul.f32 %v741, %v736
        %v743 = vmul.f32 %v737, %v737
        %v744 = vsub.f32 %v742, %v743
        %v745 = vsub.f32 %v723, %v737
        %v746 = vadd.f32 %v744, 1e-05
        %v747 = vrsqrt.pop %v746
        %v748 = vmul.f32 %v747, %v746
        %v749 = vmul.f32 %v748, %v747
        %v750 = vmul.f32 0.5, %v749
        %v751 = vsub.f32 1.5, %v750
        %v752 = vmul.f32 %v747, %v751
        %vm753 = vweird.f32 %v746
        %vm754 = vweird.f32 %v747
        %vm755 = vmor %vm753, %vm754
        %v756 = vsel %vm755, %v747, %v752
        %v757 = vmul.f32 %v745, %v756
        %v759 = vperm.slane %v724, 0
        %v761 = vmul.f32 %v757, %v759
        %v763 = vperm.slane %v725, 0
        %v765 = vadd.f32 %v761, %v763
        %v766 = vpack.c.bf16 %v765, %v765
        %v767 = vld [vmem:[%s674] sm:$0xf]
        %v768 = vld [vmem:[%s674 + $0x4] sm:$0xf]
        %v769 = vld [vmem:[%s674 + $0x8] sm:$0xf]
        %v770 = vld [vmem:[%s674 + $0xc] sm:$0xf]
        %v771 = vld [vmem:[%s674 + $0x10] sm:$0xf]
        %v772 = vld [vmem:[%s674 + $0x14] sm:$0xf]
        %v773 = vld [vmem:[%s674 + $0x18] sm:$0xf]
        %v774 = vld [vmem:[%s674 + $0x1c] sm:$0xf]
        %v775 = vld [vmem:[%s674 + $0x20] sm:$0xf]
        %v776 = vld [vmem:[%s674 + $0x24] sm:$0xf]
        %v777 = vld [vmem:[%s674 + $0x28] sm:$0xf]
        %v778 = vld [vmem:[%s674 + $0x2c] sm:$0xf]
        %v779 = vld [vmem:[%s674 + $0x30] sm:$0xf]
        %v780 = vld [vmem:[%s674 + $0x34] sm:$0xf]
        %v781 = vld [vmem:[%s674 + $0x38] sm:$0xf]
        %v782 = vld [vmem:[%s674 + $0x3c] sm:$0xf]
        %v783 = vld [vmem:[%s679] sm:$0xf]
        %v784 = vld [vmem:[%s679 + $0x4] sm:$0xf]
        %v785 = vld [vmem:[%s679 + $0x8] sm:$0xf]
        %v786 = vld [vmem:[%s679 + $0xc] sm:$0xf]
        %v787 = vld [vmem:[%s679 + $0x10] sm:$0xf]
        %v788 = vld [vmem:[%s679 + $0x14] sm:$0xf]
        %v789 = vld [vmem:[%s679 + $0x18] sm:$0xf]
        %v790 = vld [vmem:[%s679 + $0x1c] sm:$0xf]
        %v791 = vld [vmem:[%s679 + $0x20] sm:$0xf]
        %v792 = vld [vmem:[%s679 + $0x24] sm:$0xf]
        %v793 = vld [vmem:[%s679 + $0x28] sm:$0xf]
        %v794 = vld [vmem:[%s679 + $0x2c] sm:$0xf]
        %v795 = vld [vmem:[%s679 + $0x30] sm:$0xf]
        %v796 = vld [vmem:[%s679 + $0x34] sm:$0xf]
        %v797 = vld [vmem:[%s679 + $0x38] sm:$0xf]
        %v798 = vld [vmem:[%s679 + $0x3c] sm:$0xf]
        %v799 = vld [vmem:[%s684] sm:$0xf]
        %v800 = vld [vmem:[%s684 + $0x4] sm:$0xf]
        %v801 = vld [vmem:[%s684 + $0x8] sm:$0xf]
        %v802 = vld [vmem:[%s684 + $0xc] sm:$0xf]
        %v803 = vld [vmem:[%s684 + $0x10] sm:$0xf]
        %v804 = vld [vmem:[%s684 + $0x14] sm:$0xf]
        %v805 = vld [vmem:[%s684 + $0x18] sm:$0xf]
        %v806 = vld [vmem:[%s684 + $0x1c] sm:$0xf]
        %v807 = vld [vmem:[%s684 + $0x20] sm:$0xf]
        %v808 = vld [vmem:[%s684 + $0x24] sm:$0xf]
        %v809 = vld [vmem:[%s684 + $0x28] sm:$0xf]
        %v810 = vld [vmem:[%s684 + $0x2c] sm:$0xf]
        %v811 = vld [vmem:[%s684 + $0x30] sm:$0xf]
        %v812 = vld [vmem:[%s684 + $0x34] sm:$0xf]
        %v813 = vld [vmem:[%s684 + $0x38] sm:$0xf]
        %v814 = vld [vmem:[%s684 + $0x3c] sm:$0xf]
        %v815 = vld [vmem:[%s689] sm:$0xf]
        %v816 = vld [vmem:[%s689 + $0x4] sm:$0xf]
        %v817 = vld [vmem:[%s689 + $0x8] sm:$0xf]
        %v818 = vld [vmem:[%s689 + $0xc] sm:$0xf]
        %v823 = vunpack.c.l.b16 %v767
        %v824 = vunpack.c.l.b16 %v768
        %v825 = vunpack.c.l.b16 %v769
        %v826 = vunpack.c.l.b16 %v770
        %v827 = vpack.c.b16 %v824, %v823
        %v828 = vpack.c.b16 %v826, %v825
        %v832 = vsel %vm726, %v766, 0
        %834 = vmatpush.bf16.msra.mxu0 0
        %835 = vmatpush.bf16.msra.mxu0 0
        %836 = vmatpush.bf16.msra.mxu0 0
        %837 = vmatpush.bf16.msra.mxu0 0
        %838 = vmatpush.bf16.msra.mxu0 0
        %839 = vmatpush.bf16.msra.mxu0 0
        %840 = vmatpush.bf16.msra.mxu0 %v828
        %841 = vmatpush.bf16.msra.mxu0 %v827
        %842 = vmatmul.bf16.gmra.mxu0 %v832
        %v843 = vpop.f32.mrf.mxu0
        %v844 = vadd.f32 0.0, %v843
        %v845 = vpop.f32.mrf.mxu0
        %846 = vdwg.mxu0
        %v847 = vpack.c.bf16 %v844, %v844
        %v852 = vunpack.c.l.b16 %v771
        %v853 = vunpack.c.l.b16 %v772
        %v854 = vunpack.c.l.b16 %v773
        %v855 = vunpack.c.l.b16 %v774
        %v856 = vpack.c.b16 %v853, %v852
        %v857 = vpack.c.b16 %v855, %v854
        %860 = vmatpush.bf16.msra.mxu0 0
        %861 = vmatpush.bf16.msra.mxu0 0
        %862 = vmatpush.bf16.msra.mxu0 0
        %863 = vmatpush.bf16.msra.mxu0 0
        %864 = vmatpush.bf16.msra.mxu0 0
        %865 = vmatpush.bf16.msra.mxu0 0
        %866 = vmatpush.bf16.msra.mxu0 %v857
        %867 = vmatpush.bf16.msra.mxu0 %v856
        %868 = vmatmul.bf16.gmra.mxu0 %v832
        %v869 = vpop.f32.mrf.mxu0
        %v870 = vadd.f32 0.0, %v869
        %v871 = vpop.f32.mrf.mxu0
        %872 = vdwg.mxu0
        %v873 = vpack.c.bf16 %v870, %v870
        %v878 = vunpack.c.l.b16 %v775
        %v879 = vunpack.c.l.b16 %v776
        %v880 = vunpack.c.l.b16 %v777
        %v881 = vunpack.c.l.b16 %v778
        %v882 = vpack.c.b16 %v879, %v878
        %v883 = vpack.c.b16 %v881, %v880
        %886 = vmatpush.bf16.msra.mxu0 0
        %887 = vmatpush.bf16.msra.mxu0 0
        %888 = vmatpush.bf16.msra.mxu0 0
        %889 = vmatpush.bf16.msra.mxu0 0
        %890 = vmatpush.bf16.msra.mxu0 0
        %891 = vmatpush.bf16.msra.mxu0 0
        %892 = vmatpush.bf16.msra.mxu0 %v883
        %893 = vmatpush.bf16.msra.mxu0 %v882
        %894 = vmatmul.bf16.gmra.mxu0 %v832
        %v895 = vpop.f32.mrf.mxu0
        %v896 = vadd.f32 0.0, %v895
        %v897 = vpop.f32.mrf.mxu0
        %898 = vdwg.mxu0
        %v899 = vpack.c.bf16 %v896, %v896
        %v904 = vunpack.c.l.b16 %v779
        %v905 = vunpack.c.l.b16 %v780
        %v906 = vunpack.c.l.b16 %v781
        %v907 = vunpack.c.l.b16 %v782
        %v908 = vpack.c.b16 %v905, %v904
        %v909 = vpack.c.b16 %v907, %v906
        %912 = vmatpush.bf16.msra.mxu0 0
        %913 = vmatpush.bf16.msra.mxu0 0
        %914 = vmatpush.bf16.msra.mxu0 0
        %915 = vmatpush.bf16.msra.mxu0 0
        %916 = vmatpush.bf16.msra.mxu0 0
        %917 = vmatpush.bf16.msra.mxu0 0
        %918 = vmatpush.bf16.msra.mxu0 %v909
        %919 = vmatpush.bf16.msra.mxu0 %v908
        %920 = vmatmul.bf16.gmra.mxu0 %v832
        %v921 = vpop.f32.mrf.mxu0
        %v922 = vadd.f32 0.0, %v921
        %v923 = vpop.f32.mrf.mxu0
        %924 = vdwg.mxu0
        %v925 = vpack.c.bf16 %v922, %v922
        %v930 = vunpack.c.l.b16 %v783
        %v931 = vunpack.c.l.b16 %v784
        %v932 = vunpack.c.l.b16 %v785
        %v933 = vunpack.c.l.b16 %v786
        %v934 = vpack.c.b16 %v931, %v930
        %v935 = vpack.c.b16 %v933, %v932
        %938 = vmatpush.bf16.msra.mxu0 0
        %939 = vmatpush.bf16.msra.mxu0 0
        %940 = vmatpush.bf16.msra.mxu0 0
        %941 = vmatpush.bf16.msra.mxu0 0
        %942 = vmatpush.bf16.msra.mxu0 0
        %943 = vmatpush.bf16.msra.mxu0 0
        %944 = vmatpush.bf16.msra.mxu0 %v935
        %945 = vmatpush.bf16.msra.mxu0 %v934
        %946 = vmatmul.bf16.gmra.mxu0 %v832
        %v947 = vpop.f32.mrf.mxu0
        %v948 = vadd.f32 0.0, %v947
        %v949 = vpop.f32.mrf.mxu0
        %950 = vdwg.mxu0
        %v951 = vpack.c.bf16 %v948, %v948
        %v956 = vunpack.c.l.b16 %v787
        %v957 = vunpack.c.l.b16 %v788
        %v958 = vunpack.c.l.b16 %v789
        %v959 = vunpack.c.l.b16 %v790
        %v960 = vpack.c.b16 %v957, %v956
        %v961 = vpack.c.b16 %v959, %v958
        %964 = vmatpush.bf16.msra.mxu0 0
        %965 = vmatpush.bf16.msra.mxu0 0
        %966 = vmatpush.bf16.msra.mxu0 0
        %967 = vmatpush.bf16.msra.mxu0 0
        %968 = vmatpush.bf16.msra.mxu0 0
        %969 = vmatpush.bf16.msra.mxu0 0
        %970 = vmatpush.bf16.msra.mxu0 %v961
        %971 = vmatpush.bf16.msra.mxu0 %v960
        %972 = vmatmul.bf16.gmra.mxu0 %v832
        %v973 = vpop.f32.mrf.mxu0
        %v974 = vadd.f32 0.0, %v973
        %v975 = vpop.f32.mrf.mxu0
        %976 = vdwg.mxu0
        %v977 = vpack.c.bf16 %v974, %v974
        %v982 = vunpack.c.l.b16 %v791
        %v983 = vunpack.c.l.b16 %v792
        %v984 = vunpack.c.l.b16 %v793
        %v985 = vunpack.c.l.b16 %v794
        %v986 = vpack.c.b16 %v983, %v982
        %v987 = vpack.c.b16 %v985, %v984
        %990 = vmatpush.bf16.msra.mxu0 0
        %991 = vmatpush.bf16.msra.mxu0 0
        %992 = vmatpush.bf16.msra.mxu0 0
        %993 = vmatpush.bf16.msra.mxu0 0
        %994 = vmatpush.bf16.msra.mxu0 0
        %995 = vmatpush.bf16.msra.mxu0 0
        %996 = vmatpush.bf16.msra.mxu0 %v987
        %997 = vmatpush.bf16.msra.mxu0 %v986
        %998 = vmatmul.bf16.gmra.mxu0 %v832
        %v999 = vpop.f32.mrf.mxu0
        %v1000 = vadd.f32 0.0, %v999
        %v1001 = vpop.f32.mrf.mxu0
        %1002 = vdwg.mxu0
        %v1003 = vpack.c.bf16 %v1000, %v1000
        %v1008 = vunpack.c.l.b16 %v795
        %v1009 = vunpack.c.l.b16 %v796
        %v1010 = vunpack.c.l.b16 %v797
        %v1011 = vunpack.c.l.b16 %v798
        %v1012 = vpack.c.b16 %v1009, %v1008
        %v1013 = vpack.c.b16 %v1011, %v1010
        %1016 = vmatpush.bf16.msra.mxu0 0
        %1017 = vmatpush.bf16.msra.mxu0 0
        %1018 = vmatpush.bf16.msra.mxu0 0
        %1019 = vmatpush.bf16.msra.mxu0 0
        %1020 = vmatpush.bf16.msra.mxu0 0
        %1021 = vmatpush.bf16.msra.mxu0 0
        %1022 = vmatpush.bf16.msra.mxu0 %v1013
        %1023 = vmatpush.bf16.msra.mxu0 %v1012
        %1024 = vmatmul.bf16.gmra.mxu0 %v832
        %v1025 = vpop.f32.mrf.mxu0
        %v1026 = vadd.f32 0.0, %v1025
        %v1027 = vpop.f32.mrf.mxu0
        %1028 = vdwg.mxu0
        %v1029 = vpack.c.bf16 %v1026, %v1026
        %v1034 = vunpack.c.l.b16 %v799
        %v1035 = vunpack.c.l.b16 %v800
        %v1036 = vunpack.c.l.b16 %v801
        %v1037 = vunpack.c.l.b16 %v802
        %v1038 = vpack.c.b16 %v1035, %v1034
        %v1039 = vpack.c.b16 %v1037, %v1036
        %1042 = vmatpush.bf16.msra.mxu0 0
        %1043 = vmatpush.bf16.msra.mxu0 0
        %1044 = vmatpush.bf16.msra.mxu0 0
        %1045 = vmatpush.bf16.msra.mxu0 0
        %1046 = vmatpush.bf16.msra.mxu0 0
        %1047 = vmatpush.bf16.msra.mxu0 0
        %1048 = vmatpush.bf16.msra.mxu0 %v1039
        %1049 = vmatpush.bf16.msra.mxu0 %v1038
        %1050 = vmatmul.bf16.gmra.mxu0 %v832
        %v1051 = vpop.f32.mrf.mxu0
        %v1052 = vadd.f32 0.0, %v1051
        %v1053 = vpop.f32.mrf.mxu0
        %1054 = vdwg.mxu0
        %v1055 = vpack.c.bf16 %v1052, %v1052
        %v1060 = vunpack.c.l.b16 %v803
        %v1061 = vunpack.c.l.b16 %v804
        %v1062 = vunpack.c.l.b16 %v805
        %v1063 = vunpack.c.l.b16 %v806
        %v1064 = vpack.c.b16 %v1061, %v1060
        %v1065 = vpack.c.b16 %v1063, %v1062
        %1068 = vmatpush.bf16.msra.mxu0 0
        %1069 = vmatpush.bf16.msra.mxu0 0
        %1070 = vmatpush.bf16.msra.mxu0 0
        %1071 = vmatpush.bf16.msra.mxu0 0
        %1072 = vmatpush.bf16.msra.mxu0 0
        %1073 = vmatpush.bf16.msra.mxu0 0
        %1074 = vmatpush.bf16.msra.mxu0 %v1065
        %1075 = vmatpush.bf16.msra.mxu0 %v1064
        %1076 = vmatmul.bf16.gmra.mxu0 %v832
        %v1077 = vpop.f32.mrf.mxu0
        %v1078 = vadd.f32 0.0, %v1077
        %v1079 = vpop.f32.mrf.mxu0
        %1080 = vdwg.mxu0
        %v1081 = vpack.c.bf16 %v1078, %v1078
        %v1086 = vunpack.c.l.b16 %v807
        %v1087 = vunpack.c.l.b16 %v808
        %v1088 = vunpack.c.l.b16 %v809
        %v1089 = vunpack.c.l.b16 %v810
        %v1090 = vpack.c.b16 %v1087, %v1086
        %v1091 = vpack.c.b16 %v1089, %v1088
        %1094 = vmatpush.bf16.msra.mxu0 0
        %1095 = vmatpush.bf16.msra.mxu0 0
        %1096 = vmatpush.bf16.msra.mxu0 0
        %1097 = vmatpush.bf16.msra.mxu0 0
        %1098 = vmatpush.bf16.msra.mxu0 0
        %1099 = vmatpush.bf16.msra.mxu0 0
        %1100 = vmatpush.bf16.msra.mxu0 %v1091
        %1101 = vmatpush.bf16.msra.mxu0 %v1090
        %1102 = vmatmul.bf16.gmra.mxu0 %v832
        %v1103 = vpop.f32.mrf.mxu0
        %v1104 = vadd.f32 0.0, %v1103
        %v1105 = vpop.f32.mrf.mxu0
        %1106 = vdwg.mxu0
        %v1107 = vpack.c.bf16 %v1104, %v1104
        %v1112 = vunpack.c.l.b16 %v811
        %v1113 = vunpack.c.l.b16 %v812
        %v1114 = vunpack.c.l.b16 %v813
        %v1115 = vunpack.c.l.b16 %v814
        %v1116 = vpack.c.b16 %v1113, %v1112
        %v1117 = vpack.c.b16 %v1115, %v1114
        %1120 = vmatpush.bf16.msra.mxu0 0
        %1121 = vmatpush.bf16.msra.mxu0 0
        %1122 = vmatpush.bf16.msra.mxu0 0
        %1123 = vmatpush.bf16.msra.mxu0 0
        %1124 = vmatpush.bf16.msra.mxu0 0
        %1125 = vmatpush.bf16.msra.mxu0 0
        %1126 = vmatpush.bf16.msra.mxu0 %v1117
        %1127 = vmatpush.bf16.msra.mxu0 %v1116
        %1128 = vmatmul.bf16.gmra.mxu0 %v832
        %v1129 = vpop.f32.mrf.mxu0
        %v1130 = vadd.f32 0.0, %v1129
        %v1131 = vpop.f32.mrf.mxu0
        %1132 = vdwg.mxu0
        %v1133 = vpack.c.bf16 %v1130, %v1130
        %vm1134 = vcmask 64512
        %v1136 = vsel %vm1134, %v847, 0
        %v1139 = vsel %vm1134, %v951, 0
        %1141 = vmatpush.bf16.xpose.msra.mxu0 0
        %1142 = vmatpush.bf16.xpose.msra.mxu0 0
        %1143 = vmatpush.bf16.xpose.msra.mxu0 0
        %1144 = vmatpush.bf16.xpose.msra.mxu0 0
        %1145 = vmatpush.bf16.xpose.msra.mxu0 0
        %1146 = vmatpush.bf16.xpose.msra.mxu0 0
        %1147 = vmatpush.bf16.xpose.msra.mxu0 0
        %1148 = vmatpush.bf16.xpose.msra.mxu0 %v1139
        %1149 = vmatmul.bf16.gmra.mxu0 %v1136
        %v1150 = vpop.f32.mrf.mxu0
        %v1151 = vadd.f32 0.0, %v1150
        %v1152 = vpop.f32.mrf.mxu0
        %1153 = vdwg.mxu0
        %v1155 = vsel %vm1134, %v873, 0
        %v1158 = vsel %vm1134, %v977, 0
        %1160 = vmatpush.bf16.xpose.msra.mxu0 0
        %1161 = vmatpush.bf16.xpose.msra.mxu0 0
        %1162 = vmatpush.bf16.xpose.msra.mxu0 0
        %1163 = vmatpush.bf16.xpose.msra.mxu0 0
        %1164 = vmatpush.bf16.xpose.msra.mxu0 0
        %1165 = vmatpush.bf16.xpose.msra.mxu0 0
        %1166 = vmatpush.bf16.xpose.msra.mxu0 0
        %1167 = vmatpush.bf16.xpose.msra.mxu0 %v1158
        %1168 = vmatmul.bf16.gmra.mxu0 %v1155
        %v1169 = vpop.f32.mrf.mxu0
        %v1170 = vadd.f32 0.0, %v1169
        %v1171 = vpop.f32.mrf.mxu0
        %1172 = vdwg.mxu0
        %v1174 = vsel %vm1134, %v899, 0
        %v1177 = vsel %vm1134, %v1003, 0
        %1179 = vmatpush.bf16.xpose.msra.mxu0 0
        %1180 = vmatpush.bf16.xpose.msra.mxu0 0
        %1181 = vmatpush.bf16.xpose.msra.mxu0 0
        %1182 = vmatpush.bf16.xpose.msra.mxu0 0
        %1183 = vmatpush.bf16.xpose.msra.mxu0 0
        %1184 = vmatpush.bf16.xpose.msra.mxu0 0
        %1185 = vmatpush.bf16.xpose.msra.mxu0 0
        %1186 = vmatpush.bf16.xpose.msra.mxu0 %v1177
        %1187 = vmatmul.bf16.gmra.mxu0 %v1174
        %v1188 = vpop.f32.mrf.mxu0
        %v1189 = vadd.f32 0.0, %v1188
        %v1190 = vpop.f32.mrf.mxu0
        %1191 = vdwg.mxu0
        %v1193 = vsel %vm1134, %v925, 0
        %v1196 = vsel %vm1134, %v1029, 0
        %1198 = vmatpush.bf16.xpose.msra.mxu0 0
        %1199 = vmatpush.bf16.xpose.msra.mxu0 0
        %1200 = vmatpush.bf16.xpose.msra.mxu0 0
        %1201 = vmatpush.bf16.xpose.msra.mxu0 0
        %1202 = vmatpush.bf16.xpose.msra.mxu0 0
        %1203 = vmatpush.bf16.xpose.msra.mxu0 0
        %1204 = vmatpush.bf16.xpose.msra.mxu0 0
        %1205 = vmatpush.bf16.xpose.msra.mxu0 %v1196
        %1206 = vmatmul.bf16.gmra.mxu0 %v1193
        %v1207 = vpop.f32.mrf.mxu0
        %v1208 = vadd.f32 0.0, %v1207
        %v1209 = vpop.f32.mrf.mxu0
        %1210 = vdwg.mxu0
        %v1211 = vsel %vm1134, %v1151, -inf
        %1212 = vmax.xlane.f32.xlu0 %v1211
        %v1213 = vpop.xlane.xlu0 %1212
        %v1214 = vsel %vm1134, %v1170, -inf
        %1215 = vmax.xlane.f32.xlu0 %v1214
        %v1216 = vpop.xlane.xlu0 %1215
        %v1217 = vsel %vm1134, %v1189, -inf
        %1218 = vmax.xlane.f32.xlu0 %v1217
        %v1219 = vpop.xlane.xlu0 %1218
        %v1220 = vsel %vm1134, %v1208, -inf
        %1221 = vmax.xlane.f32.xlu0 %v1220
        %v1222 = vpop.xlane.xlu0 %1221
        %v1223 = vsub.f32 %v1151, %v1213
        %v1224 = vsub.f32 %v1170, %v1216
        %v1225 = vsub.f32 %v1189, %v1219
        %v1226 = vsub.f32 %v1208, %v1222
        %v1227 = vmul.f32 %v1223, 1.442695
        %v1228 = vpow.pop %v1227
        %v1229 = vmul.f32 %v1224, 1.442695
        %v1230 = vpow.pop %v1229
        %v1231 = vmul.f32 %v1225, 1.442695
        %v1232 = vpow.pop %v1231
        %v1233 = vmul.f32 %v1226, 1.442695
        %v1234 = vpow.pop %v1233
        %v1235 = vsel %vm1134, %v1228, 0.0
        %1236 = vadd.xlane.f32.xlu0 %v1235
        %v1237 = vpop.xlane.xlu0 %1236
        %v1238 = vsel %vm1134, %v1230, 0.0
        %1239 = vadd.xlane.f32.xlu0 %v1238
        %v1240 = vpop.xlane.xlu0 %1239
        %v1241 = vsel %vm1134, %v1232, 0.0
        %1242 = vadd.xlane.f32.xlu0 %v1241
        %v1243 = vpop.xlane.xlu0 %1242
        %v1244 = vsel %vm1134, %v1234, 0.0
        %1245 = vadd.xlane.f32.xlu0 %v1244
        %v1246 = vpop.xlane.xlu0 %1245
        %v1247 = vpack.c.bf16 %v1228, %v1228
        %v1248 = vpack.c.bf16 %v1230, %v1230
        %v1249 = vpack.c.bf16 %v1232, %v1232
        %v1250 = vpack.c.bf16 %v1234, %v1234
        %v1252 = vsel %vm1134, %v1247, 0
        %vm1254 = vcmask 1043456
        %v1256 = vsel %vm1254, %v1055, 0
        %1258 = vmatpush.bf16.msra.mxu0 0
        %1259 = vmatpush.bf16.msra.mxu0 0
        %1260 = vmatpush.bf16.msra.mxu0 0
        %1261 = vmatpush.bf16.msra.mxu0 0
        %1262 = vmatpush.bf16.msra.mxu0 0
        %1263 = vmatpush.bf16.msra.mxu0 0
        %1264 = vmatpush.bf16.msra.mxu0 0
        %1265 = vmatpush.bf16.msra.mxu0 %v1256
        %1266 = vmatmul.bf16.gmra.mxu0 %v1252
        %v1267 = vpop.f32.mrf.mxu0
        %v1268 = vadd.f32 0.0, %v1267
        %v1269 = vpop.f32.mrf.mxu0
        %1270 = vdwg.mxu0
        %v1272 = vsel %vm1134, %v1248, 0
        %v1275 = vsel %vm1254, %v1081, 0
        %1277 = vmatpush.bf16.msra.mxu0 0
        %1278 = vmatpush.bf16.msra.mxu0 0
        %1279 = vmatpush.bf16.msra.mxu0 0
        %1280 = vmatpush.bf16.msra.mxu0 0
        %1281 = vmatpush.bf16.msra.mxu0 0
        %1282 = vmatpush.bf16.msra.mxu0 0
        %1283 = vmatpush.bf16.msra.mxu0 0
        %1284 = vmatpush.bf16.msra.mxu0 %v1275
        %1285 = vmatmul.bf16.gmra.mxu0 %v1272
        %v1286 = vpop.f32.mrf.mxu0
        %v1287 = vadd.f32 0.0, %v1286
        %v1288 = vpop.f32.mrf.mxu0
        %1289 = vdwg.mxu0
        %v1291 = vsel %vm1134, %v1249, 0
        %v1294 = vsel %vm1254, %v1107, 0
        %1296 = vmatpush.bf16.msra.mxu0 0
        %1297 = vmatpush.bf16.msra.mxu0 0
        %1298 = vmatpush.bf16.msra.mxu0 0
        %1299 = vmatpush.bf16.msra.mxu0 0
        %1300 = vmatpush.bf16.msra.mxu0 0
        %1301 = vmatpush.bf16.msra.mxu0 0
        %1302 = vmatpush.bf16.msra.mxu0 0
        %1303 = vmatpush.bf16.msra.mxu0 %v1294
        %1304 = vmatmul.bf16.gmra.mxu0 %v1291
        %v1305 = vpop.f32.mrf.mxu0
        %v1306 = vadd.f32 0.0, %v1305
        %v1307 = vpop.f32.mrf.mxu0
        %1308 = vdwg.mxu0
        %v1310 = vsel %vm1134, %v1250, 0
        %v1313 = vsel %vm1254, %v1133, 0
        %1315 = vmatpush.bf16.msra.mxu0 0
        %1316 = vmatpush.bf16.msra.mxu0 0
        %1317 = vmatpush.bf16.msra.mxu0 0
        %1318 = vmatpush.bf16.msra.mxu0 0
        %1319 = vmatpush.bf16.msra.mxu0 0
        %1320 = vmatpush.bf16.msra.mxu0 0
        %1321 = vmatpush.bf16.msra.mxu0 0
        %1322 = vmatpush.bf16.msra.mxu0 %v1313
        %1323 = vmatmul.bf16.gmra.mxu0 %v1310
        %v1324 = vpop.f32.mrf.mxu0
        %v1325 = vadd.f32 0.0, %v1324
        %v1326 = vpop.f32.mrf.mxu0
        %1327 = vdwg.mxu0
        %v1328 = vrcp.pop %v1237
        %v1329 = vrcp.pop %v1240
        %v1330 = vrcp.pop %v1243
        %v1331 = vrcp.pop %v1246
        %v1332 = vmul.f32 %v1268, %v1328
        %v1333 = vmul.f32 %v1287, %v1329
        %v1334 = vmul.f32 %v1306, %v1330
        %v1335 = vmul.f32 %v1325, %v1331
        %v1336 = vpack.c.bf16 %v1332, %v1332
        %v1337 = vpack.c.bf16 %v1333, %v1333
        %v1338 = vpack.c.bf16 %v1334, %v1334
        %v1339 = vpack.c.bf16 %v1335, %v1335
        %v1341 = vsel %vm1134, %v1336, 0
        %v1344 = vsel %vm1254, %v815, 0
        %1346 = vmatpush.bf16.msra.mxu0 0
        %1347 = vmatpush.bf16.msra.mxu0 0
        %1348 = vmatpush.bf16.msra.mxu0 0
        %1349 = vmatpush.bf16.msra.mxu0 0
        %1350 = vmatpush.bf16.msra.mxu0 0
        %1351 = vmatpush.bf16.msra.mxu0 0
        %1352 = vmatpush.bf16.msra.mxu0 0
        %1353 = vmatpush.bf16.msra.mxu0 %v1344
        %1354 = vmatmul.bf16.gmra.mxu0 %v1341
        %v1355 = vpop.f32.mrf.mxu0
        %v1356 = vadd.f32 0.0, %v1355
        %v1357 = vpop.f32.mrf.mxu0
        %1358 = vdwg.mxu0
        %v1360 = vsel %vm1134, %v1337, 0
        %v1363 = vsel %vm1254, %v816, 0
        %1365 = vmatpush.bf16.msra.mxu0 0
        %1366 = vmatpush.bf16.msra.mxu0 0
        %1367 = vmatpush.bf16.msra.mxu0 0
        %1368 = vmatpush.bf16.msra.mxu0 0
        %1369 = vmatpush.bf16.msra.mxu0 0
        %1370 = vmatpush.bf16.msra.mxu0 0
        %1371 = vmatpush.bf16.msra.mxu0 0
        %1372 = vmatpush.bf16.msra.mxu0 %v1363
        %1373 = vmatmul.bf16.gmra.mxu0 %v1360
        %v1374 = vpop.f32.mrf.mxu0
        %v1375 = vadd.f32 0.0, %v1374
        %v1376 = vpop.f32.mrf.mxu0
        %1377 = vdwg.mxu0
        %v1379 = vsel %vm1134, %v1338, 0
        %v1382 = vsel %vm1254, %v817, 0
        %1384 = vmatpush.bf16.msra.mxu0 0
        %1385 = vmatpush.bf16.msra.mxu0 0
        %1386 = vmatpush.bf16.msra.mxu0 0
        %1387 = vmatpush.bf16.msra.mxu0 0
        %1388 = vmatpush.bf16.msra.mxu0 0
        %1389 = vmatpush.bf16.msra.mxu0 0
        %1390 = vmatpush.bf16.msra.mxu0 0
        %1391 = vmatpush.bf16.msra.mxu0 %v1382
        %1392 = vmatmul.bf16.gmra.mxu0 %v1379
        %v1393 = vpop.f32.mrf.mxu0
        %v1394 = vadd.f32 0.0, %v1393
        %v1395 = vpop.f32.mrf.mxu0
        %1396 = vdwg.mxu0
        %v1398 = vsel %vm1134, %v1339, 0
        %v1401 = vsel %vm1254, %v818, 0
        %1403 = vmatpush.bf16.msra.mxu0 0
        %1404 = vmatpush.bf16.msra.mxu0 0
        %1405 = vmatpush.bf16.msra.mxu0 0
        %1406 = vmatpush.bf16.msra.mxu0 0
        %1407 = vmatpush.bf16.msra.mxu0 0
        %1408 = vmatpush.bf16.msra.mxu0 0
        %1409 = vmatpush.bf16.msra.mxu0 0
        %1410 = vmatpush.bf16.msra.mxu0 %v1401
        %1411 = vmatmul.bf16.gmra.mxu0 %v1398
        %v1412 = vpop.f32.mrf.mxu0
        %v1413 = vadd.f32 0.0, %v1412
        %v1414 = vpop.f32.mrf.mxu0
        %1415 = vdwg.mxu0
        %v1416 = vsel %vm726, %v1356, 0.0
        %v1417 = vsel %vm726, %v1375, 0.0
        %v1418 = vadd.f32 %v1416, %v1417
        %v1419 = vsel %vm726, %v1394, 0.0
        %v1420 = vadd.f32 %v1418, %v1419
        %v1421 = vsel %vm726, %v1413, 0.0
        %v1422 = vadd.f32 %v1420, %v1421
        %v1423 = vld [vmem:[%s692] sm:$0x1]
        %v1425 = vperm.slane %v1423, 0
        %v1427 = vadd.f32 %v1422, %v1425
        %v1428 = vadd.f32 %v723, %v1427
        %v1429 = vld [vmem:[%s695] sm:$0x1]
        %v1430 = vld [vmem:[%s698] sm:$0x1]
        %v1431 = vsel %vm726, %v1428, 0.0
        %1432 = vadd.xlane.f32.xlu0 %v1431
        %v1433 = vpop.xlane.xlu0 %1432
        %v1434 = vmul.f32 %v1433, %v736
        %v1435 = vmul.f32 %v1428, %v1428
        %v1436 = vsel %vm726, %v1435, 0.0
        %1437 = vadd.xlane.f32.xlu0 %v1436
        %v1438 = vpop.xlane.xlu0 %1437
        %v1439 = vmul.f32 %v1438, %v736
        %v1440 = vmul.f32 %v1434, %v1434
        %v1441 = vsub.f32 %v1439, %v1440
        %v1442 = vsub.f32 %v1428, %v1434
        %v1443 = vadd.f32 %v1441, 1e-05
        %v1444 = vrsqrt.pop %v1443
        %v1445 = vmul.f32 %v1444, %v1443
        %v1446 = vmul.f32 %v1445, %v1444
        %v1447 = vmul.f32 0.5, %v1446
        %v1448 = vsub.f32 1.5, %v1447
        %v1449 = vmul.f32 %v1444, %v1448
        %vm1450 = vweird.f32 %v1443
        %vm1451 = vweird.f32 %v1444
        %vm1452 = vmor %vm1450, %vm1451
        %v1453 = vsel %vm1452, %v1444, %v1449
        %v1454 = vmul.f32 %v1442, %v1453
        %v1456 = vperm.slane %v1429, 0
        %v1458 = vmul.f32 %v1454, %v1456
        %v1460 = vperm.slane %v1430, 0
        %v1462 = vadd.f32 %v1458, %v1460
        %v1463 = vpack.c.bf16 %v1462, %v1462
        %v1464 = vld [vmem:[%s703] sm:$0xf]
        %v1465 = vld [vmem:[%s703 + $0x4] sm:$0xf]
        %v1466 = vld [vmem:[%s703 + $0x8] sm:$0xf]
        %v1467 = vld [vmem:[%s703 + $0xc] sm:$0xf]
        %v1468 = vld [vmem:[%s706] sm:$0x1]
        %v1470 = vperm.slane %v1468, 0
        %v1476 = vunpack.c.l.b16 %v1464
        %v1477 = vunpack.c.l.b16 %v1465
        %v1478 = vunpack.c.l.b16 %v1466
        %v1479 = vunpack.c.l.b16 %v1467
        %v1480 = vpack.c.b16 %v1477, %v1476
        %v1481 = vpack.c.b16 %v1479, %v1478
        %v1485 = vsel %vm726, %v1463, 0
        %1487 = vmatpush.bf16.msra.mxu0 0
        %1488 = vmatpush.bf16.msra.mxu0 0
        %1489 = vmatpush.bf16.msra.mxu0 0
        %1490 = vmatpush.bf16.msra.mxu0 0
        %1491 = vmatpush.bf16.msra.mxu0 0
        %1492 = vmatpush.bf16.msra.mxu0 0
        %1493 = vmatpush.bf16.msra.mxu0 %v1481
        %1494 = vmatpush.bf16.msra.mxu0 %v1480
        %1495 = vmatmul.bf16.gmra.mxu0 %v1485
        %v1496 = vpop.f32.mrf.mxu0
        %v1497 = vadd.f32 %v1470, %v1496
        %v1498 = vpop.f32.mrf.mxu0
        %1499 = vdwg.mxu0
        %v1500 = vmax.f32 %v1497, 0.0
        %v1501 = vpack.c.bf16 %v1500, %v1500
        %v1502 = vld [vmem:[%s711] sm:$0xf]
        %v1503 = vld [vmem:[%s711 + $0x4] sm:$0xf]
        %v1504 = vld [vmem:[%s711 + $0x8] sm:$0xf]
        %v1505 = vld [vmem:[%s711 + $0xc] sm:$0xf]
        %v1506 = vld [vmem:[%s711 + $0x10] sm:$0xf]
        %v1507 = vld [vmem:[%s711 + $0x14] sm:$0xf]
        %v1508 = vld [vmem:[%s711 + $0x18] sm:$0xf]
        %v1509 = vld [vmem:[%s711 + $0x1c] sm:$0xf]
        %v1510 = vld [vmem:[%s714] sm:$0x1]
        %v1512 = vperm.slane %v1510, 0
        %v1522 = vunpack.c.l.b16 %v1502
        %v1523 = vunpack.c.l.b16 %v1503
        %v1524 = vunpack.c.l.b16 %v1504
        %v1525 = vunpack.c.l.b16 %v1505
        %v1526 = vunpack.c.l.b16 %v1506
        %v1527 = vunpack.c.l.b16 %v1507
        %v1528 = vunpack.c.l.b16 %v1508
        %v1529 = vunpack.c.l.b16 %v1509
        %v1530 = vpack.c.b16 %v1523, %v1522
        %v1531 = vpack.c.b16 %v1525, %v1524
        %v1532 = vpack.c.b16 %v1527, %v1526
        %v1533 = vpack.c.b16 %v1529, %v1528
        %vm1538 = vcmask 523264
        %v1540 = vsel %vm1538, %v1501, 0
        %1542 = vmatpush.bf16.msra.mxu0 0
        %1543 = vmatpush.bf16.msra.mxu0 0
        %1544 = vmatpush.bf16.msra.mxu0 0
        %1545 = vmatpush.bf16.msra.mxu0 0
        %1546 = vmatpush.bf16.msra.mxu0 %v1533
        %1547 = vmatpush.bf16.msra.mxu0 %v1532
        %1548 = vmatpush.bf16.msra.mxu0 %v1531
        %1549 = vmatpush.bf16.msra.mxu0 %v1530
        %1550 = vmatmul.bf16.gmra.mxu0 %v1540
        %v1551 = vpop.f32.mrf.mxu0
        %v1552 = vadd.f32 %v1512, %v1551
        %v1553 = vpop.f32.mrf.mxu0
        %1554 = vdwg.mxu0
        %v1555 = vadd.f32 %v1428, %v1552
        %1556 = vst.msk [vmem:[#allocation2] sm:$0xff] %vm726, %v1555
        %p1557 = scmp.eq.s32.totalorder %s36, 1
        // Predicated region
        $region85: #{tpu_custom_call.1} parent=75 // pred_check
          %p1558 = pneg %p1557
        $region86: #{tpu_custom_call.1} parent=75 // pred_check_branch
          %1560 = sbr.rel (%p1558) target = $region88
        $region87: #{tpu_custom_call.1} parent=75 // pred_region
          %1561 = vst.msk [vmem:[%s663] sm:$0xff] %vm726, %v1555
        $region88: #{tpu_custom_call.1} parent=75 // pred_fallthru
          _
        %s1562 = sand.u32 %s415, 1
        %s1563 = scalar_lea.sflag [#allocation5], %s1562
        %s1564 = sand.u32 %s415, 1
        %s1565 = smul.addr %s1564, 8
        %s1566 = scalar_lea.vmem [#allocation6], %s1565
        // Predicated region
        $region89: #{tpu_custom_call.1} parent=75 // pred_check
          %p1567 = pneg %p425
        $region90: #{tpu_custom_call.1} parent=75 // pred_check_branch
          %1569 = sbr.rel (%p1567) target = $region92
        $region91: #{tpu_custom_call.1} parent=75 // pred_region
          %1571 = vsyncadd %s1563, 0
          %s1572 = smul.addr %s35, 8
          %s1573 = scalar_lea.hbm %s14, %s1572
          %s1575 = sshll.u32 %s1566, 4
          %s1576 = int_to_ptr.vmem [resolvable:$true] %s1575
          %s1577 = sshll.u32 %s1573, 4
          %s1578 = int_to_ptr.hbm [resolvable:$true] %s1577
          %1580 = dma.vmem_to_hbm [thread:$0]  %s1576, 128, %s1578, %s1563
        $region92: #{tpu_custom_call.1} parent=75 // pred_fallthru
          _
      $region76: #{tpu_custom_call.1} parent=5 // pred_fallthru
        _
      %p1581 = scmp.le.s32.totalorder 2, %s26
      // Predicated region
      $region93: #{tpu_custom_call.1} parent=5 // pred_check
        %p1582 = pneg %p1581
      $region94: #{tpu_custom_call.1} parent=5 // pred_check_branch
        %1584 = sbr.rel (%p1582) target = $region96
      $region95: #{tpu_custom_call.1} parent=5 // pred_region
        %s1585 = ssub.s32 %s26, 2
        // Predicated region
        $region97: #{tpu_custom_call.1} parent=95 // pred_check
          %p1586 = pneg %p431
        $region98: #{tpu_custom_call.1} parent=95 // pred_check_branch
          %1588 = sbr.rel (%p1586) target = $region100
        $region99: #{tpu_custom_call.1} parent=95 // pred_region
          %s1589 = sand.u32 %s416, 1
          %s1590 = scalar_lea.sflag [#allocation5], %s1589
          %s1591 = sand.u32 %s416, 1
          %s1592 = smul.addr %s1591, 8
          %s1593 = scalar_lea.vmem [#allocation6], %s1592
          %1595 = dma.done %s1590, 128
        $region100: #{tpu_custom_call.1} parent=95 // pred_fallthru
          _
      $region96: #{tpu_custom_call.1} parent=5 // pred_fallthru
        _
    $region6: #{tpu_custom_call.1} parent=1 // loop_footer
      %s30 = sadd.s32 1, %s26
    $region7: #{tpu_custom_call.1} parent=1 // loop_footer_branch
      %25 = sbr.rel target = $region3
    $region8: #{tpu_custom_call.1} parent=1 // loop_exit
      _
    %1596 = vsyncpa [#allocation4], 1
    %s1597 = scalar_lea.sflag [#allocation4], 1
    %1598 = vsyncpa %s1597, 1
    %1599 = vsyncpa [#allocation5], 1
    %s1600 = scalar_lea.sflag [#allocation5], 1
    %1601 = vsyncpa %s1600, 1

</llo_original>
